<compile_context>
chip_gen: v5e
topology: v5e:2x2
jax: 0.10.0
libtpu: 0.0.40
codegen_flags: <defaults>
</compile_context>

<pallas_src>
import jax
import jax.numpy as jnp
from jax.experimental import pallas as pl
from jax.experimental.pallas import tpu as pltpu


def _round_up(x, m):
    return ((x + m - 1) // m) * m


def _vmem_limit_bytes() -> int:
    """Per-generation scoped-VMEM request with headroom for compiler scratch."""
    cap = 64 * 1024 * 1024                      # safe fallback (v7x physical)
    try:
        cap = int(pltpu.get_tpu_info().vmem_capacity_bytes)
    except Exception:
        pass
    # v7x (64 MiB physical) -> ~48 MiB request; v5e/v6e (128 MiB) -> 100 MiB.
    return int(min(max(cap - 16 * 1024 * 1024, 32 * 1024 * 1024),
                   100 * 1024 * 1024))


def _pick_row_tile(N, Ho, Wo, Wc, C, Coutp, out_bytes, vmem_limit):
    """Largest multiple-of-8 output-row tile whose per-step footprint fits VMEM."""
    budget = int(vmem_limit * 0.6)              # leave slack for taps / scratch
    per_row = (6 * 2 * Wc * C * 2               # six bf16 phase blocks, 2 buffers
               + 2 * Wo * Coutp * out_bytes     # output block, 2 buffers
               + Wo * Coutp * 4                 # f32 accumulator value
               + 2 * Wo * C * 2)                # tap temporaries (slack)
    fixed = 2 * 9 * C * Coutp * 2 + 2 * Coutp * 4   # weights + bias buffers
    tile = max(8, ((budget - fixed) // per_row) // 8 * 8)
    tile = min(tile, _round_up(Ho, 8))
    n_tiles = -(-Ho // tile)
    if N * n_tiles < 2 and Ho > 8:              # keep >= 2 parallel steps (v7x megacore)
        n_tiles = 2
    # Balance tiles so the final tile is not mostly padded rows (wasted MXU/HBM).
    tile = _round_up(-(-Ho // n_tiles), 8)
    n_tiles = -(-Ho // tile)
    return tile, n_tiles


def _downsample_conv_kernel(pee, peo, poe, poo, pse, pso, w_ref, b_ref, o_ref):
    """One (batch, output-row-tile) step of the stride-2 3x3 conv.

    Blocks (batch dim squeezed):
      pee/peo : (tile_ho, Wc, C) bf16 -- padded rows 2*o   , even/odd columns
      poe/poo : (tile_ho, Wc, C) bf16 -- padded rows 2*o+1 , even/odd columns
      pse/pso : (tile_ho, Wc, C) bf16 -- padded rows 2*o+2 , even/odd columns
      w_ref   : (9, C, Coutp) bf16    -- per-tap weights, tap = ky*3+kx
      b_ref   : (1, Coutp) f32        -- bias (zero-padded lanes)
      o_ref   : (tile_ho*Wo, Coutp)   -- flattened output rows (bf16 or f32)
    """
    tile_ho, wc, c = pee.shape
    wo = wc - 1
    n_rows, coutp = o_ref.shape

    # Start the accumulator from the broadcast bias: saves one full zero-fill
    # and one broadcast add per grid step, and keeps the add-chain shape-stable.
    acc = jnp.broadcast_to(b_ref[...], (n_rows, coutp)).astype(jnp.float32)

    # (even-col ref, odd-col ref) for each kernel row ky.
    row_refs = ((pee, peo), (poe, poo), (pse, pso))
    for ky in range(3):
        ev, od = row_refs[ky]
        for kx in range(3):
            src = ev if kx % 2 == 0 else od
            c0 = kx // 2                        # kx==2 -> column-shifted slice
            # Slice the ref directly (free addressing), one load per tap.
            tap = src[:, c0:c0 + wo, :].reshape(n_rows, c)
            acc = acc + jnp.dot(tap, w_ref[ky * 3 + kx],
                                preferred_element_type=jnp.float32)

    o_ref[...] = acc.astype(o_ref.dtype)


def downsample_pallas(x, weight, bias, *, tile_ho=None,
                      out_dtype=jnp.bfloat16, compute_dtype=jnp.bfloat16):
    """Flux Downsample: pad (0,1,0,1) then Conv2d(C, C, 3, stride=2), NCHW API.

    x: (N, C, H, W); weight: (Cout, Cin, 3, 3); bias: (Cout,).
    Inputs/weights are cast to `compute_dtype` (f32 accumulation); the result
    dtype is `out_dtype` (bf16 default per perf review; pass jnp.float32 to
    match PyTorch output precision more closely).
    """
    N, C, H, W = x.shape
    Cout, Cin, KH, KW = weight.shape
    assert Cin == C and KH == 3 and KW == 3

    Ho = (H + 1 - 3) // 2 + 1                  # output rows after pad(+1) conv
    Wo = (W + 1 - 3) // 2 + 1
    Wc = Wo + 1                                # phase cols (incl. kx==2 halo col)
    Coutp = _round_up(Cout, 128)               # lane-dense output channels
    out_bytes = jnp.dtype(out_dtype).itemsize

    vmem_limit = _vmem_limit_bytes()
    if tile_ho is None:
        tile, n_row_tiles = _pick_row_tile(N, Ho, Wo, Wc, C, Coutp,
                                           out_bytes, vmem_limit)
    else:
        assert tile_ho % 8 == 0 and tile_ho > 0
        tile, n_row_tiles = tile_ho, -(-Ho // tile_ho)
    Ho_pad = n_row_tiles * tile

    # Single combined NHWC transpose + cast + zero pad (the module's (+1,+1)
    # plus row/col alignment for the phase slices).
    Hp_big = 2 * Ho_pad + 2
    Wp_big = 2 * Wc
    xq = jnp.transpose(x, (0, 2, 3, 1)).astype(compute_dtype)
    xq = jnp.pad(xq, ((0, 0), (0, Hp_big - H), (0, Wp_big - W), (0, 0)))

    # Stride-2 phase decomposition: row offset r in {0,1,2} x column parity.
    # All six arrays have shape (N, Ho_pad, Wc, C); output row o of kernel row
    # ky reads row o of the r==ky family, so every block is plainly row-tiled.
    pee = xq[:, 0:2 * Ho_pad:2,     0::2, :]
    peo = xq[:, 0:2 * Ho_pad:2,     1::2, :]
    poe = xq[:, 1:2 * Ho_pad + 1:2, 0::2, :]
    poo = xq[:, 1:2 * Ho_pad + 1:2, 1::2, :]
    pse = xq[:, 2:2 * Ho_pad + 2:2, 0::2, :]
    pso = xq[:, 2:2 * Ho_pad + 2:2, 1::2, :]

    # Weights: (Cout, Cin, 3, 3) -> (9, Cin, Coutp), tap = ky*3+kx, bf16.
    wmat = jnp.transpose(weight, (2, 3, 1, 0)).reshape(9, C, Cout)
    wmat = jnp.pad(wmat, ((0, 0), (0, 0), (0, Coutp - Cout))).astype(compute_dtype)
    bvec = jnp.pad(bias.astype(jnp.float32), (0, Coutp - Cout)).reshape(1, Coutp)

    # Phases are row-tiled; weights/bias use constant block indices so they are
    # only DMA'd once (Pallas skips re-fetch when the block index is unchanged).
    phase_spec = pl.BlockSpec((None, tile, Wc, C), lambda n, i: (n, i, 0, 0))
    w_spec = pl.BlockSpec((9, C, Coutp), lambda n, i: (0, 0, 0))
    b_spec = pl.BlockSpec((1, Coutp), lambda n, i: (0, 0))
    out_spec = pl.BlockSpec((None, tile * Wo, Coutp), lambda n, i: (n, i, 0))

    itm = jnp.dtype(compute_dtype).itemsize
    cost = pl.CostEstimate(
        flops=2 * N * Ho * Wo * 9 * C * Cout,
        transcendentals=0,
        bytes_accessed=int(6 * N * Ho_pad * Wc * C * itm
                           + 9 * C * Coutp * itm
                           + N * Ho_pad * Wo * Coutp * out_bytes),
    )

    out = pl.pallas_call(
        _downsample_conv_kernel,
        out_shape=jax.ShapeDtypeStruct((N, Ho_pad * Wo, Coutp), out_dtype),
        grid_spec=pltpu.PrefetchScalarGridSpec(
            num_scalar_prefetch=0,
            grid=(N, n_row_tiles),
            in_specs=[phase_spec, phase_spec, phase_spec,
                      phase_spec, phase_spec, phase_spec,
                      w_spec, b_spec],
            out_specs=out_spec,
        ),
        compiler_params=pltpu.CompilerParams(
            dimension_semantics=("parallel", "parallel"),
            vmem_limit_bytes=vmem_limit),
        cost_estimate=cost,
    )(pee, peo, poe, poo, pse, pso, wmat, bvec)

    out = out.reshape(N, Ho_pad, Wo, Coutp)[:, :Ho, :, :Cout]
    return jnp.transpose(out, (0, 3, 1, 2))     # NCHW, like the PyTorch module


if __name__ == "__main__":
    key = jax.random.PRNGKey(0)
    k_x, k_w, k_b = jax.random.split(key, 3)

    N, C, H, W = 2, 4, 16, 16
    x = jax.random.normal(k_x, (N, C, H, W), dtype=jnp.float32)
    weight = jax.random.normal(k_w, (C, C, 3, 3), dtype=jnp.float32) * 0.1
    bias = jax.random.normal(k_b, (C,), dtype=jnp.float32) * 0.1

    # Reference: XLA conv with the module's pad=(0,1,0,1) then stride-2 VALID conv.
    xp = jnp.pad(x, ((0, 0), (0, 0), (0, 1), (0, 1)))
    ref = jax.lax.conv_general_dilated(
        xp, weight, window_strides=(2, 2), padding="VALID",
        dimension_numbers=("NCHW", "OIHW", "NCHW"),
    ) + bias.reshape(1, C, 1, 1)

    # Default (bf16 output) path.
    out_bf16 = jax.block_until_ready(jax.jit(downsample_pallas)(x, weight, bias))
    assert out_bf16.shape == ref.shape == (N, C, 8, 8), (out_bf16.shape, ref.shape)
    assert out_bf16.dtype == jnp.bfloat16
    err_bf16 = float(jnp.max(jnp.abs(out_bf16.astype(jnp.float32) - ref)))
    assert err_bf16 < 1e-1, err_bf16

    # f32-output path (accuracy bounded by the bf16 input/weight cast).
    fn_f32 = jax.jit(lambda a, w, b: downsample_pallas(a, w, b, out_dtype=jnp.float32))
    out_f32 = jax.block_until_ready(fn_f32(x, weight, bias))
    err_f32 = float(jnp.max(jnp.abs(out_f32 - ref)))
    assert jnp.allclose(out_f32, ref, atol=5e-2, rtol=5e-2), err_f32

    print("KERNEL_OK")
</pallas_src>

<mosaic_0001>
module attributes {stable_mosaic.version = 11 : i64} {
  func.func @_downsample_conv_kernel(%arg0: i32, %arg1: i32, %arg2: memref<1x8x9x4xbf16, #tpu.memory_space<vmem>>, %arg3: memref<1x8x9x4xbf16, #tpu.memory_space<vmem>>, %arg4: memref<1x8x9x4xbf16, #tpu.memory_space<vmem>>, %arg5: memref<1x8x9x4xbf16, #tpu.memory_space<vmem>>, %arg6: memref<1x8x9x4xbf16, #tpu.memory_space<vmem>>, %arg7: memref<1x8x9x4xbf16, #tpu.memory_space<vmem>>, %arg8: memref<9x4x128xbf16, #tpu.memory_space<vmem>>, %arg9: memref<1x128xf32, #tpu.memory_space<vmem>>, %arg10: memref<1x64x128xbf16, #tpu.memory_space<vmem>>) attributes {dimension_semantics = [#tpu.dimension_semantics<parallel>, #tpu.dimension_semantics<parallel>], iteration_bounds = array<i64: 2, 1>, scalar_prefetch = 0 : i64, scratch_operands = 0 : i64, tpu.core_type = #tpu.core_type<tc>, window_params = [{transform_indices = @transform_0, window_bounds = array<i64: 1, 8, 9, 4>}, {transform_indices = @transform_1, window_bounds = array<i64: 1, 8, 9, 4>}, {transform_indices = @transform_2, window_bounds = array<i64: 1, 8, 9, 4>}, {transform_indices = @transform_3, window_bounds = array<i64: 1, 8, 9, 4>}, {transform_indices = @transform_4, window_bounds = array<i64: 1, 8, 9, 4>}, {transform_indices = @transform_5, window_bounds = array<i64: 1, 8, 9, 4>}, {pipeline_mode = #tpu.pipeline_mode<synchronous>, transform_indices = @transform_6, window_bounds = array<i64: 9, 4, 128>}, {pipeline_mode = #tpu.pipeline_mode<synchronous>, transform_indices = @transform_7, window_bounds = array<i64: 1, 128>}, {transform_indices = @transform_8, window_bounds = array<i64: 1, 64, 128>}]} {
    %c0 = arith.constant 0 : index
    %c0_0 = arith.constant 0 : index
    %0 = vector.load %arg9[%c0, %c0_0] : memref<1x128xf32, #tpu.memory_space<vmem>>, vector<1x128xf32>
    %1 = vector.shape_cast %0 : vector<1x128xf32> to vector<1x128xf32>
    %2 = vector.broadcast %1 : vector<1x128xf32> to vector<64x128xf32>
    %c0_1 = arith.constant 0 : index
    %c0_2 = arith.constant 0 : index
    %c0_3 = arith.constant 0 : index
    %c0_4 = arith.constant 0 : index
    %3 = vector.load %arg2[%c0_1, %c0_2, %c0_3, %c0_4] : memref<1x8x9x4xbf16, #tpu.memory_space<vmem>>, vector<1x8x8x4xbf16>
    %4 = vector.shape_cast %3 : vector<1x8x8x4xbf16> to vector<8x8x4xbf16>
    %5 = vector.shape_cast %4 : vector<8x8x4xbf16> to vector<64x4xbf16>
    %c0_5 = arith.constant 0 : index
    %c0_6 = arith.constant 0 : index
    %c0_7 = arith.constant 0 : index
    %6 = vector.load %arg8[%c0_5, %c0_6, %c0_7] : memref<9x4x128xbf16, #tpu.memory_space<vmem>>, vector<1x4x128xbf16>
    %7 = vector.shape_cast %6 : vector<1x4x128xbf16> to vector<4x128xbf16>
    %cst = arith.constant dense<0.000000e+00> : vector<64x128xf32>
    %8 = tpu.matmul %5, %7, %cst {dimension_numbers = #tpu.dot_dimension_numbers<[1], [0], [0], [1], [0, 0, 1, 1], [], []>} : vector<64x4xbf16>, vector<4x128xbf16>, vector<64x128xf32> -> vector<64x128xf32>
    %9 = arith.addf %2, %8 : vector<64x128xf32>
    %c0_8 = arith.constant 0 : index
    %c0_9 = arith.constant 0 : index
    %c0_10 = arith.constant 0 : index
    %c0_11 = arith.constant 0 : index
    %10 = vector.load %arg3[%c0_8, %c0_9, %c0_10, %c0_11] : memref<1x8x9x4xbf16, #tpu.memory_space<vmem>>, vector<1x8x8x4xbf16>
    %11 = vector.shape_cast %10 : vector<1x8x8x4xbf16> to vector<8x8x4xbf16>
    %12 = vector.shape_cast %11 : vector<8x8x4xbf16> to vector<64x4xbf16>
    %c1 = arith.constant 1 : index
    %c0_12 = arith.constant 0 : index
    %c0_13 = arith.constant 0 : index
    %13 = vector.load %arg8[%c1, %c0_12, %c0_13] : memref<9x4x128xbf16, #tpu.memory_space<vmem>>, vector<1x4x128xbf16>
    %14 = vector.shape_cast %13 : vector<1x4x128xbf16> to vector<4x128xbf16>
    %cst_14 = arith.constant dense<0.000000e+00> : vector<64x128xf32>
    %15 = tpu.matmul %12, %14, %cst_14 {dimension_numbers = #tpu.dot_dimension_numbers<[1], [0], [0], [1], [0, 0, 1, 1], [], []>} : vector<64x4xbf16>, vector<4x128xbf16>, vector<64x128xf32> -> vector<64x128xf32>
    %16 = arith.addf %9, %15 : vector<64x128xf32>
    %c0_15 = arith.constant 0 : index
    %c0_16 = arith.constant 0 : index
    %c1_17 = arith.constant 1 : index
    %c0_18 = arith.constant 0 : index
    %17 = vector.load %arg2[%c0_15, %c0_16, %c1_17, %c0_18] : memref<1x8x9x4xbf16, #tpu.memory_space<vmem>>, vector<1x8x8x4xbf16>
    %18 = vector.shape_cast %17 : vector<1x8x8x4xbf16> to vector<8x8x4xbf16>
    %19 = vector.shape_cast %18 : vector<8x8x4xbf16> to vector<64x4xbf16>
    %c2 = arith.constant 2 : index
    %c0_19 = arith.constant 0 : index
    %c0_20 = arith.constant 0 : index
    %20 = vector.load %arg8[%c2, %c0_19, %c0_20] : memref<9x4x128xbf16, #tpu.memory_space<vmem>>, vector<1x4x128xbf16>
    %21 = vector.shape_cast %20 : vector<1x4x128xbf16> to vector<4x128xbf16>
    %cst_21 = arith.constant dense<0.000000e+00> : vector<64x128xf32>
    %22 = tpu.matmul %19, %21, %cst_21 {dimension_numbers = #tpu.dot_dimension_numbers<[1], [0], [0], [1], [0, 0, 1, 1], [], []>} : vector<64x4xbf16>, vector<4x128xbf16>, vector<64x128xf32> -> vector<64x128xf32>
    %23 = arith.addf %16, %22 : vector<64x128xf32>
    %c0_22 = arith.constant 0 : index
    %c0_23 = arith.constant 0 : index
    %c0_24 = arith.constant 0 : index
    %c0_25 = arith.constant 0 : index
    %24 = vector.load %arg4[%c0_22, %c0_23, %c0_24, %c0_25] : memref<1x8x9x4xbf16, #tpu.memory_space<vmem>>, vector<1x8x8x4xbf16>
    %25 = vector.shape_cast %24 : vector<1x8x8x4xbf16> to vector<8x8x4xbf16>
    %26 = vector.shape_cast %25 : vector<8x8x4xbf16> to vector<64x4xbf16>
    %c3 = arith.constant 3 : index
    %c0_26 = arith.constant 0 : index
    %c0_27 = arith.constant 0 : index
    %27 = vector.load %arg8[%c3, %c0_26, %c0_27] : memref<9x4x128xbf16, #tpu.memory_space<vmem>>, vector<1x4x128xbf16>
    %28 = vector.shape_cast %27 : vector<1x4x128xbf16> to vector<4x128xbf16>
    %cst_28 = arith.constant dense<0.000000e+00> : vector<64x128xf32>
    %29 = tpu.matmul %26, %28, %cst_28 {dimension_numbers = #tpu.dot_dimension_numbers<[1], [0], [0], [1], [0, 0, 1, 1], [], []>} : vector<64x4xbf16>, vector<4x128xbf16>, vector<64x128xf32> -> vector<64x128xf32>
    %30 = arith.addf %23, %29 : vector<64x128xf32>
    %c0_29 = arith.constant 0 : index
    %c0_30 = arith.constant 0 : index
    %c0_31 = arith.constant 0 : index
    %c0_32 = arith.constant 0 : index
    %31 = vector.load %arg5[%c0_29, %c0_30, %c0_31, %c0_32] : memref<1x8x9x4xbf16, #tpu.memory_space<vmem>>, vector<1x8x8x4xbf16>
    %32 = vector.shape_cast %31 : vector<1x8x8x4xbf16> to vector<8x8x4xbf16>
    %33 = vector.shape_cast %32 : vector<8x8x4xbf16> to vector<64x4xbf16>
    %c4 = arith.constant 4 : index
    %c0_33 = arith.constant 0 : index
    %c0_34 = arith.constant 0 : index
    %34 = vector.load %arg8[%c4, %c0_33, %c0_34] : memref<9x4x128xbf16, #tpu.memory_space<vmem>>, vector<1x4x128xbf16>
    %35 = vector.shape_cast %34 : vector<1x4x128xbf16> to vector<4x128xbf16>
    %cst_35 = arith.constant dense<0.000000e+00> : vector<64x128xf32>
    %36 = tpu.matmul %33, %35, %cst_35 {dimension_numbers = #tpu.dot_dimension_numbers<[1], [0], [0], [1], [0, 0, 1, 1], [], []>} : vector<64x4xbf16>, vector<4x128xbf16>, vector<64x128xf32> -> vector<64x128xf32>
    %37 = arith.addf %30, %36 : vector<64x128xf32>
    %c0_36 = arith.constant 0 : index
    %c0_37 = arith.constant 0 : index
    %c1_38 = arith.constant 1 : index
    %c0_39 = arith.constant 0 : index
    %38 = vector.load %arg4[%c0_36, %c0_37, %c1_38, %c0_39] : memref<1x8x9x4xbf16, #tpu.memory_space<vmem>>, vector<1x8x8x4xbf16>
    %39 = vector.shape_cast %38 : vector<1x8x8x4xbf16> to vector<8x8x4xbf16>
    %40 = vector.shape_cast %39 : vector<8x8x4xbf16> to vector<64x4xbf16>
    %c5 = arith.constant 5 : index
    %c0_40 = arith.constant 0 : index
    %c0_41 = arith.constant 0 : index
    %41 = vector.load %arg8[%c5, %c0_40, %c0_41] : memref<9x4x128xbf16, #tpu.memory_space<vmem>>, vector<1x4x128xbf16>
    %42 = vector.shape_cast %41 : vector<1x4x128xbf16> to vector<4x128xbf16>
    %cst_42 = arith.constant dense<0.000000e+00> : vector<64x128xf32>
    %43 = tpu.matmul %40, %42, %cst_42 {dimension_numbers = #tpu.dot_dimension_numbers<[1], [0], [0], [1], [0, 0, 1, 1], [], []>} : vector<64x4xbf16>, vector<4x128xbf16>, vector<64x128xf32> -> vector<64x128xf32>
    %44 = arith.addf %37, %43 : vector<64x128xf32>
    %c0_43 = arith.constant 0 : index
    %c0_44 = arith.constant 0 : index
    %c0_45 = arith.constant 0 : index
    %c0_46 = arith.constant 0 : index
    %45 = vector.load %arg6[%c0_43, %c0_44, %c0_45, %c0_46] : memref<1x8x9x4xbf16, #tpu.memory_space<vmem>>, vector<1x8x8x4xbf16>
    %46 = vector.shape_cast %45 : vector<1x8x8x4xbf16> to vector<8x8x4xbf16>
    %47 = vector.shape_cast %46 : vector<8x8x4xbf16> to vector<64x4xbf16>
    %c6 = arith.constant 6 : index
    %c0_47 = arith.constant 0 : index
    %c0_48 = arith.constant 0 : index
    %48 = vector.load %arg8[%c6, %c0_47, %c0_48] : memref<9x4x128xbf16, #tpu.memory_space<vmem>>, vector<1x4x128xbf16>
    %49 = vector.shape_cast %48 : vector<1x4x128xbf16> to vector<4x128xbf16>
    %cst_49 = arith.constant dense<0.000000e+00> : vector<64x128xf32>
    %50 = tpu.matmul %47, %49, %cst_49 {dimension_numbers = #tpu.dot_dimension_numbers<[1], [0], [0], [1], [0, 0, 1, 1], [], []>} : vector<64x4xbf16>, vector<4x128xbf16>, vector<64x128xf32> -> vector<64x128xf32>
    %51 = arith.addf %44, %50 : vector<64x128xf32>
    %c0_50 = arith.constant 0 : index
    %c0_51 = arith.constant 0 : index
    %c0_52 = arith.constant 0 : index
    %c0_53 = arith.constant 0 : index
    %52 = vector.load %arg7[%c0_50, %c0_51, %c0_52, %c0_53] : memref<1x8x9x4xbf16, #tpu.memory_space<vmem>>, vector<1x8x8x4xbf16>
    %53 = vector.shape_cast %52 : vector<1x8x8x4xbf16> to vector<8x8x4xbf16>
    %54 = vector.shape_cast %53 : vector<8x8x4xbf16> to vector<64x4xbf16>
    %c7 = arith.constant 7 : index
    %c0_54 = arith.constant 0 : index
    %c0_55 = arith.constant 0 : index
    %55 = vector.load %arg8[%c7, %c0_54, %c0_55] : memref<9x4x128xbf16, #tpu.memory_space<vmem>>, vector<1x4x128xbf16>
    %56 = vector.shape_cast %55 : vector<1x4x128xbf16> to vector<4x128xbf16>
    %cst_56 = arith.constant dense<0.000000e+00> : vector<64x128xf32>
    %57 = tpu.matmul %54, %56, %cst_56 {dimension_numbers = #tpu.dot_dimension_numbers<[1], [0], [0], [1], [0, 0, 1, 1], [], []>} : vector<64x4xbf16>, vector<4x128xbf16>, vector<64x128xf32> -> vector<64x128xf32>
    %58 = arith.addf %51, %57 : vector<64x128xf32>
    %c0_57 = arith.constant 0 : index
    %c0_58 = arith.constant 0 : index
    %c1_59 = arith.constant 1 : index
    %c0_60 = arith.constant 0 : index
    %59 = vector.load %arg6[%c0_57, %c0_58, %c1_59, %c0_60] : memref<1x8x9x4xbf16, #tpu.memory_space<vmem>>, vector<1x8x8x4xbf16>
    %60 = vector.shape_cast %59 : vector<1x8x8x4xbf16> to vector<8x8x4xbf16>
    %61 = vector.shape_cast %60 : vector<8x8x4xbf16> to vector<64x4xbf16>
    %c8 = arith.constant 8 : index
    %c0_61 = arith.constant 0 : index
    %c0_62 = arith.constant 0 : index
    %62 = vector.load %arg8[%c8, %c0_61, %c0_62] : memref<9x4x128xbf16, #tpu.memory_space<vmem>>, vector<1x4x128xbf16>
    %63 = vector.shape_cast %62 : vector<1x4x128xbf16> to vector<4x128xbf16>
    %cst_63 = arith.constant dense<0.000000e+00> : vector<64x128xf32>
    %64 = tpu.matmul %61, %63, %cst_63 {dimension_numbers = #tpu.dot_dimension_numbers<[1], [0], [0], [1], [0, 0, 1, 1], [], []>} : vector<64x4xbf16>, vector<4x128xbf16>, vector<64x128xf32> -> vector<64x128xf32>
    %65 = arith.addf %58, %64 : vector<64x128xf32>
    %66 = arith.truncf %65 : vector<64x128xf32> to vector<64x128xbf16>
    %c0_64 = arith.constant 0 : index
    %c0_65 = arith.constant 0 : index
    %c0_66 = arith.constant 0 : index
    %67 = vector.load %arg10[%c0_64, %c0_65, %c0_66] : memref<1x64x128xbf16, #tpu.memory_space<vmem>>, vector<1x64x128xbf16>
    %68 = vector.shape_cast %67 : vector<1x64x128xbf16> to vector<64x128xbf16>
    %69 = vector.shape_cast %66 : vector<64x128xbf16> to vector<1x64x128xbf16>
    tpu.vector_store %arg10[%c0_64, %c0_65, %c0_66], %69 {strides = array<i32>} : memref<1x64x128xbf16, #tpu.memory_space<vmem>>, vector<1x64x128xbf16>,
    return
  }
  func.func @transform_0(%arg0: i32, %arg1: i32) -> (i32, i32, i32, i32) {
    %c0_i32 = arith.constant 0 : i32
    %c0_i32_0 = arith.constant 0 : i32
    %c0_i32_1 = arith.constant 0 : i32
    return %arg0, %arg1, %c0_i32, %c0_i32_0 : i32, i32, i32, i32
  }
  func.func @transform_1(%arg0: i32, %arg1: i32) -> (i32, i32, i32, i32) {
    %c0_i32 = arith.constant 0 : i32
    %c0_i32_0 = arith.constant 0 : i32
    %c0_i32_1 = arith.constant 0 : i32
    return %arg0, %arg1, %c0_i32, %c0_i32_0 : i32, i32, i32, i32
  }
  func.func @transform_2(%arg0: i32, %arg1: i32) -> (i32, i32, i32, i32) {
    %c0_i32 = arith.constant 0 : i32
    %c0_i32_0 = arith.constant 0 : i32
    %c0_i32_1 = arith.constant 0 : i32
    return %arg0, %arg1, %c0_i32, %c0_i32_0 : i32, i32, i32, i32
  }
  func.func @transform_3(%arg0: i32, %arg1: i32) -> (i32, i32, i32, i32) {
    %c0_i32 = arith.constant 0 : i32
    %c0_i32_0 = arith.constant 0 : i32
    %c0_i32_1 = arith.constant 0 : i32
    return %arg0, %arg1, %c0_i32, %c0_i32_0 : i32, i32, i32, i32
  }
  func.func @transform_4(%arg0: i32, %arg1: i32) -> (i32, i32, i32, i32) {
    %c0_i32 = arith.constant 0 : i32
    %c0_i32_0 = arith.constant 0 : i32
    %c0_i32_1 = arith.constant 0 : i32
    return %arg0, %arg1, %c0_i32, %c0_i32_0 : i32, i32, i32, i32
  }
  func.func @transform_5(%arg0: i32, %arg1: i32) -> (i32, i32, i32, i32) {
    %c0_i32 = arith.constant 0 : i32
    %c0_i32_0 = arith.constant 0 : i32
    %c0_i32_1 = arith.constant 0 : i32
    return %arg0, %arg1, %c0_i32, %c0_i32_0 : i32, i32, i32, i32
  }
  func.func @transform_6(%arg0: i32, %arg1: i32) -> (i32, i32, i32) {
    %c0_i32 = arith.constant 0 : i32
    %c0_i32_0 = arith.constant 0 : i32
    %c0_i32_1 = arith.constant 0 : i32
    %c0_i32_2 = arith.constant 0 : i32
    return %c0_i32, %c0_i32_0, %c0_i32_1 : i32, i32, i32
  }
  func.func @transform_7(%arg0: i32, %arg1: i32) -> (i32, i32) {
    %c0_i32 = arith.constant 0 : i32
    %c0_i32_0 = arith.constant 0 : i32
    %c0_i32_1 = arith.constant 0 : i32
    return %c0_i32, %c0_i32_0 : i32, i32
  }
  func.func @transform_8(%arg0: i32, %arg1: i32) -> (i32, i32, i32) {
    %c0_i32 = arith.constant 0 : i32
    %c0_i32_0 = arith.constant 0 : i32
    return %arg0, %arg1, %c0_i32 : i32, i32, i32
  }
}

</mosaic_0001>

<llo_original>
// kernel: downsample_pallas.1
$region0: #{downsample_pallas.1}
  #allocation0 [shape = 'u32[]', space=smem, size = 0x4, offset = 0x4, fixed_abs, tag = 'smem constant byte address 0x4 - core index']
  #allocation1 [shape = 'u32[72,128]{1,0:T(1,128)}', space=vmem, size = 0x9000, scoped, tag = 'internal scratch']
  %s0 = inlined_call_operand.vmem [shape: bf16[2,8,9,4], index: 0, kind: input, shape index: {}]
  %s1 = inlined_call_operand.vmem [shape: bf16[2,8,9,4], index: 1, kind: input, shape index: {}]
  %s2 = inlined_call_operand.vmem [shape: bf16[2,8,9,4], index: 2, kind: input, shape index: {}]
  %s3 = inlined_call_operand.vmem [shape: bf16[2,8,9,4], index: 3, kind: input, shape index: {}]
  %s4 = inlined_call_operand.vmem [shape: bf16[2,8,9,4], index: 4, kind: input, shape index: {}]
  %s5 = inlined_call_operand.vmem [shape: bf16[2,8,9,4], index: 5, kind: input, shape index: {}]
  %s6 = inlined_call_operand.vmem [shape: bf16[9,4,128], index: 6, kind: input, shape index: {}]
  %s7 = inlined_call_operand.vmem [shape: f32[1,128], index: 7, kind: input, shape index: {}]
  %s8 = inlined_call_operand.vmem [shape: bf16[2,64,128], index: 8, kind: output, shape index: {}]
  %s9 = sld [smem:[#allocation0]]
  $region65: #{downsample_pallas.1} parent=0
    _
  %s11 = ssub.s32 1, %s9
  %s12 = scalar_select 0, %s11, %s9
  loop: start=0, step=1, limit=4
  $region2: #{downsample_pallas.1} parent=0 // loop_pre_header
    _
  $region3: #{downsample_pallas.1} parent=0 // loop_header
    %s14 = sphi 0, %s18
    %p15 = scmp.ge.s32.totalorder %s14, 4
    %s21 = sphi 0, %s33
    %s22 = sphi 0, %s29
    %s23 = sphi 0, %s21
    %s24 = sphi 0, %s22
    %s25 = sphi 0, %s23
    %s26 = sphi 0, %s24
    %s38 = sphi 0, %s40
    %s41 = sphi 0, %s38
    %s42 = sphi 0, %s41
    %s58 = sphi 0, %s42
    %s66 = sphi 0, %s68
    %s69 = sphi 0, %s66
    %s70 = sphi 0, %s69
    %s86 = sphi 0, %s70
    %s94 = sphi 0, %s96
    %s97 = sphi 0, %s94
    %s98 = sphi 0, %s97
    %s114 = sphi 0, %s98
    %s122 = sphi 0, %s124
    %s125 = sphi 0, %s122
    %s126 = sphi 0, %s125
    %s142 = sphi 0, %s126
    %s150 = sphi 0, %s152
    %s153 = sphi 0, %s150
    %s154 = sphi 0, %s153
    %s170 = sphi 0, %s154
    %s178 = sphi 0, %s180
    %s181 = sphi 0, %s178
    %s182 = sphi 0, %s181
    %s198 = sphi 0, %s182
    %s202 = sphi 0, %s202
    %s204 = sphi 0, %s202
    %s205 = sphi 0, %s204
    %s219 = sphi 0, %s205
    %s223 = sphi 0, %s223
    %s225 = sphi 0, %s223
    %s226 = sphi 0, %s225
    %s240 = sphi 0, %s226
    %s248 = sphi 0, %s250
    %s251 = sphi 0, %s248
    %s252 = sphi 0, %s251
    %s268 = sphi 0, %s252
  $region4: #{downsample_pallas.1} parent=0 // loop_header_branch
    %17 = sbr.rel (%p15) target = $region8
  $region5: #{downsample_pallas.1} parent=0 // loop_body
    %s19 = ssub.s32 %s14, 1
    %s20 = ssub.s32 %s14, 2
    %s27 = sadd.s32 1, %s22
    %p28 = scmp.ge.s32.totalorder %s27, 1
    %s29 = scalar_select %p28, 0, %s27
    %s30 = sadd.s32 1, %s21
    %s31 = scalar_select %p28, %s30, %s21
    %p32 = scmp.ge.s32.totalorder %s31, 2
    %s33 = scalar_select %p32, 0, %s31
    %s34 = ssub.s32 %s21, %s33
    %s35 = ssub.s32 %s22, %s29
    %s36 = sor.u32 %s34, %s35
    %p37 = scmp.eq.s32.totalorder %s36, 0
    %s39 = sadd.s32 %s38, 1
    %s40 = scalar_select %p37, %s38, %s39
    %p43 = pneg %p37
    %p44 = scmp.eq.s32.totalorder %s14, 1
    %p45 = por %p43, %p44
    %p46 = scmp.ne.s32.totalorder %s38, %s41
    %p47 = scmp.eq.s32.totalorder %s14, 0
    %p48 = por %p46, %p47
    %p49 = scmp.ne.s32.totalorder %s38, %s41
    %p50 = scmp.eq.s32.totalorder %s19, 1
    %p51 = por %p49, %p50
    %p52 = scmp.ne.s32.totalorder %s41, %s42
    %p53 = scmp.eq.s32.totalorder %s19, 0
    %p54 = por %p52, %p53
    %p55 = scmp.ne.s32.totalorder %s41, %s42
    %p56 = scmp.eq.s32.totalorder %s20, 1
    %p57 = por %p55, %p56
    %p59 = scmp.ne.s32.totalorder %s42, %s58
    %p60 = scmp.eq.s32.totalorder %s20, 0
    %p61 = por %p59, %p60
    %s62 = ssub.s32 %s21, %s33
    %s63 = ssub.s32 %s22, %s29
    %s64 = sor.u32 %s62, %s63
    %p65 = scmp.eq.s32.totalorder %s64, 0
    %s67 = sadd.s32 %s66, 1
    %s68 = scalar_select %p65, %s66, %s67
    %p71 = pneg %p65
    %p72 = scmp.eq.s32.totalorder %s14, 1
    %p73 = por %p71, %p72
    %p74 = scmp.ne.s32.totalorder %s66, %s69
    %p75 = scmp.eq.s32.totalorder %s14, 0
    %p76 = por %p74, %p75
    %p77 = scmp.ne.s32.totalorder %s66, %s69
    %p78 = scmp.eq.s32.totalorder %s19, 1
    %p79 = por %p77, %p78
    %p80 = scmp.ne.s32.totalorder %s69, %s70
    %p81 = scmp.eq.s32.totalorder %s19, 0
    %p82 = por %p80, %p81
    %p83 = scmp.ne.s32.totalorder %s69, %s70
    %p84 = scmp.eq.s32.totalorder %s20, 1
    %p85 = por %p83, %p84
    %p87 = scmp.ne.s32.totalorder %s70, %s86
    %p88 = scmp.eq.s32.totalorder %s20, 0
    %p89 = por %p87, %p88
    %s90 = ssub.s32 %s21, %s33
    %s91 = ssub.s32 %s22, %s29
    %s92 = sor.u32 %s90, %s91
    %p93 = scmp.eq.s32.totalorder %s92, 0
    %s95 = sadd.s32 %s94, 1
    %s96 = scalar_select %p93, %s94, %s95
    %p99 = pneg %p93
    %p100 = scmp.eq.s32.totalorder %s14, 1
    %p101 = por %p99, %p100
    %p102 = scmp.ne.s32.totalorder %s94, %s97
    %p103 = scmp.eq.s32.totalorder %s14, 0
    %p104 = por %p102, %p103
    %p105 = scmp.ne.s32.totalorder %s94, %s97
    %p106 = scmp.eq.s32.totalorder %s19, 1
    %p107 = por %p105, %p106
    %p108 = scmp.ne.s32.totalorder %s97, %s98
    %p109 = scmp.eq.s32.totalorder %s19, 0
    %p110 = por %p108, %p109
    %p111 = scmp.ne.s32.totalorder %s97, %s98
    %p112 = scmp.eq.s32.totalorder %s20, 1
    %p113 = por %p111, %p112
    %p115 = scmp.ne.s32.totalorder %s98, %s114
    %p116 = scmp.eq.s32.totalorder %s20, 0
    %p117 = por %p115, %p116
    %s118 = ssub.s32 %s21, %s33
    %s119 = ssub.s32 %s22, %s29
    %s120 = sor.u32 %s118, %s119
    %p121 = scmp.eq.s32.totalorder %s120, 0
    %s123 = sadd.s32 %s122, 1
    %s124 = scalar_select %p121, %s122, %s123
    %p127 = pneg %p121
    %p128 = scmp.eq.s32.totalorder %s14, 1
    %p129 = por %p127, %p128
    %p130 = scmp.ne.s32.totalorder %s122, %s125
    %p131 = scmp.eq.s32.totalorder %s14, 0
    %p132 = por %p130, %p131
    %p133 = scmp.ne.s32.totalorder %s122, %s125
    %p134 = scmp.eq.s32.totalorder %s19, 1
    %p135 = por %p133, %p134
    %p136 = scmp.ne.s32.totalorder %s125, %s126
    %p137 = scmp.eq.s32.totalorder %s19, 0
    %p138 = por %p136, %p137
    %p139 = scmp.ne.s32.totalorder %s125, %s126
    %p140 = scmp.eq.s32.totalorder %s20, 1
    %p141 = por %p139, %p140
    %p143 = scmp.ne.s32.totalorder %s126, %s142
    %p144 = scmp.eq.s32.totalorder %s20, 0
    %p145 = por %p143, %p144
    %s146 = ssub.s32 %s21, %s33
    %s147 = ssub.s32 %s22, %s29
    %s148 = sor.u32 %s146, %s147
    %p149 = scmp.eq.s32.totalorder %s148, 0
    %s151 = sadd.s32 %s150, 1
    %s152 = scalar_select %p149, %s150, %s151
    %p155 = pneg %p149
    %p156 = scmp.eq.s32.totalorder %s14, 1
    %p157 = por %p155, %p156
    %p158 = scmp.ne.s32.totalorder %s150, %s153
    %p159 = scmp.eq.s32.totalorder %s14, 0
    %p160 = por %p158, %p159
    %p161 = scmp.ne.s32.totalorder %s150, %s153
    %p162 = scmp.eq.s32.totalorder %s19, 1
    %p163 = por %p161, %p162
    %p164 = scmp.ne.s32.totalorder %s153, %s154
    %p165 = scmp.eq.s32.totalorder %s19, 0
    %p166 = por %p164, %p165
    %p167 = scmp.ne.s32.totalorder %s153, %s154
    %p168 = scmp.eq.s32.totalorder %s20, 1
    %p169 = por %p167, %p168
    %p171 = scmp.ne.s32.totalorder %s154, %s170
    %p172 = scmp.eq.s32.totalorder %s20, 0
    %p173 = por %p171, %p172
    %s174 = ssub.s32 %s21, %s33
    %s175 = ssub.s32 %s22, %s29
    %s176 = sor.u32 %s174, %s175
    %p177 = scmp.eq.s32.totalorder %s176, 0
    %s179 = sadd.s32 %s178, 1
    %s180 = scalar_select %p177, %s178, %s179
    %p183 = pneg %p177
    %p184 = scmp.eq.s32.totalorder %s14, 1
    %p185 = por %p183, %p184
    %p186 = scmp.ne.s32.totalorder %s178, %s181
    %p187 = scmp.eq.s32.totalorder %s14, 0
    %p188 = por %p186, %p187
    %p189 = scmp.ne.s32.totalorder %s178, %s181
    %p190 = scmp.eq.s32.totalorder %s19, 1
    %p191 = por %p189, %p190
    %p192 = scmp.ne.s32.totalorder %s181, %s182
    %p193 = scmp.eq.s32.totalorder %s19, 0
    %p194 = por %p192, %p193
    %p195 = scmp.ne.s32.totalorder %s181, %s182
    %p196 = scmp.eq.s32.totalorder %s20, 1
    %p197 = por %p195, %p196
    %p199 = scmp.ne.s32.totalorder %s182, %s198
    %p200 = scmp.eq.s32.totalorder %s20, 0
    %p201 = por %p199, %p200
    %s203 = sadd.s32 %s202, 1
    %p206 = scmp.eq.s32.totalorder %s14, 1
    %p207 = scmp.ne.s32.totalorder %s202, %s204
    %p208 = scmp.eq.s32.totalorder %s14, 0
    %p209 = por %p207, %p208
    %p210 = scmp.ne.s32.totalorder %s202, %s204
    %p211 = scmp.eq.s32.totalorder %s19, 1
    %p212 = por %p210, %p211
    %p213 = scmp.ne.s32.totalorder %s204, %s205
    %p214 = scmp.eq.s32.totalorder %s19, 0
    %p215 = por %p213, %p214
    %p216 = scmp.ne.s32.totalorder %s204, %s205
    %p217 = scmp.eq.s32.totalorder %s20, 1
    %p218 = por %p216, %p217
    %p220 = scmp.ne.s32.totalorder %s205, %s219
    %p221 = scmp.eq.s32.totalorder %s20, 0
    %p222 = por %p220, %p221
    %s224 = sadd.s32 %s223, 1
    %p227 = scmp.eq.s32.totalorder %s14, 1
    %p228 = scmp.ne.s32.totalorder %s223, %s225
    %p229 = scmp.eq.s32.totalorder %s14, 0
    %p230 = por %p228, %p229
    %p231 = scmp.ne.s32.totalorder %s223, %s225
    %p232 = scmp.eq.s32.totalorder %s19, 1
    %p233 = por %p231, %p232
    %p234 = scmp.ne.s32.totalorder %s225, %s226
    %p235 = scmp.eq.s32.totalorder %s19, 0
    %p236 = por %p234, %p235
    %p237 = scmp.ne.s32.totalorder %s225, %s226
    %p238 = scmp.eq.s32.totalorder %s20, 1
    %p239 = por %p237, %p238
    %p241 = scmp.ne.s32.totalorder %s226, %s240
    %p242 = scmp.eq.s32.totalorder %s20, 0
    %p243 = por %p241, %p242
    %s244 = ssub.s32 %s21, %s33
    %s245 = ssub.s32 %s22, %s29
    %s246 = sor.u32 %s244, %s245
    %p247 = scmp.eq.s32.totalorder %s246, 0
    %s249 = sadd.s32 %s248, 1
    %s250 = scalar_select %p247, %s248, %s249
    %p253 = pneg %p247
    %p254 = scmp.eq.s32.totalorder %s14, 1
    %p255 = por %p253, %p254
    %p256 = scmp.ne.s32.totalorder %s248, %s251
    %p257 = scmp.eq.s32.totalorder %s14, 0
    %p258 = por %p256, %p257
    %p259 = scmp.ne.s32.totalorder %s248, %s251
    %p260 = scmp.eq.s32.totalorder %s19, 1
    %p261 = por %p259, %p260
    %p262 = scmp.ne.s32.totalorder %s251, %s252
    %p263 = scmp.eq.s32.totalorder %s19, 0
    %p264 = por %p262, %p263
    %p265 = scmp.ne.s32.totalorder %s251, %s252
    %p266 = scmp.eq.s32.totalorder %s20, 1
    %p267 = por %p265, %p266
    %p269 = scmp.ne.s32.totalorder %s252, %s268
    %p270 = scmp.eq.s32.totalorder %s20, 0
    %p271 = por %p269, %p270
    %p272 = scmp.le.s32.totalorder 1, %s14
    %p273 = scmp.lt.s32.totalorder %s14, 3
    %p274 = pnand %p272, %p273
    %p275 = pneg %p274
    // Predicated region
    $region9: #{downsample_pallas.1} parent=5 // pred_check
      _
    $region10: #{downsample_pallas.1} parent=5 // pred_check_branch
      %277 = sbr.rel (%p274) target = $region12
    $region11: #{downsample_pallas.1} parent=5 // pred_region
      %s278 = ssub.s32 %s14, 1
      // Predicated region
      $region13: #{downsample_pallas.1} parent=11 // pred_check
        %p279 = pneg %p215
      $region14: #{downsample_pallas.1} parent=11 // pred_check_branch
        %281 = sbr.rel (%p279) target = $region16
      $region15: #{downsample_pallas.1} parent=11 // pred_region
        _
      $region16: #{downsample_pallas.1} parent=11 // pred_fallthru
        _
      // Predicated region
      $region17: #{downsample_pallas.1} parent=11 // pred_check
        %p282 = pneg %p236
      $region18: #{downsample_pallas.1} parent=11 // pred_check_branch
        %284 = sbr.rel (%p282) target = $region20
      $region19: #{downsample_pallas.1} parent=11 // pred_region
        _
      $region20: #{downsample_pallas.1} parent=11 // pred_fallthru
        _
    $region12: #{downsample_pallas.1} parent=5 // pred_fallthru
      _
    %p285 = scmp.lt.s32.totalorder %s14, 2
    // Predicated region
    $region21: #{downsample_pallas.1} parent=5 // pred_check
      %p286 = pneg %p285
    $region22: #{downsample_pallas.1} parent=5 // pred_check_branch
      %288 = sbr.rel (%p286) target = $region24
    $region23: #{downsample_pallas.1} parent=5 // pred_region
      // Predicated region
      $region25: #{downsample_pallas.1} parent=23 // pred_check
        %p289 = pneg %p48
      $region26: #{downsample_pallas.1} parent=23 // pred_check_branch
        %291 = sbr.rel (%p289) target = $region28
      $region27: #{downsample_pallas.1} parent=23 // pred_region
        %s292 = smul.u32 8, %s22
        %p293 = scmp.lt.s32.totalorder %s21, 1
        %s294 = scalar_select %p293, %s21, 1
        %p295 = scmp.lt.s32.totalorder %s292, 7
        %s296 = scalar_select %p295, %s292, 7
        %s297 = smul.addr %s296, 2
        %s298 = smul.addr %s294, 16
        %s299 = sadd.s32 %s297, %s298
        %s300 = smul.addr %s299, 4
        %s301 = scalar_lea.vmem %s0, %s300
        %s302 = smul.u32 8, %s22
      $region28: #{downsample_pallas.1} parent=23 // pred_fallthru
        _
      // Predicated region
      $region29: #{downsample_pallas.1} parent=23 // pred_check
        %p303 = pneg %p76
      $region30: #{downsample_pallas.1} parent=23 // pred_check_branch
        %305 = sbr.rel (%p303) target = $region32
      $region31: #{downsample_pallas.1} parent=23 // pred_region
        %s306 = smul.u32 8, %s22
        %p307 = scmp.lt.s32.totalorder %s21, 1
        %s308 = scalar_select %p307, %s21, 1
        %p309 = scmp.lt.s32.totalorder %s306, 7
        %s310 = scalar_select %p309, %s306, 7
        %s311 = smul.addr %s310, 2
        %s312 = smul.addr %s308, 16
        %s313 = sadd.s32 %s311, %s312
        %s314 = smul.addr %s313, 4
        %s315 = scalar_lea.vmem %s1, %s314
        %s316 = smul.u32 8, %s22
      $region32: #{downsample_pallas.1} parent=23 // pred_fallthru
        _
      // Predicated region
      $region33: #{downsample_pallas.1} parent=23 // pred_check
        %p317 = pneg %p104
      $region34: #{downsample_pallas.1} parent=23 // pred_check_branch
        %319 = sbr.rel (%p317) target = $region36
      $region35: #{downsample_pallas.1} parent=23 // pred_region
        %s320 = smul.u32 8, %s22
        %p321 = scmp.lt.s32.totalorder %s21, 1
        %s322 = scalar_select %p321, %s21, 1
        %p323 = scmp.lt.s32.totalorder %s320, 7
        %s324 = scalar_select %p323, %s320, 7
        %s325 = smul.addr %s324, 2
        %s326 = smul.addr %s322, 16
        %s327 = sadd.s32 %s325, %s326
        %s328 = smul.addr %s327, 4
        %s329 = scalar_lea.vmem %s2, %s328
        %s330 = smul.u32 8, %s22
      $region36: #{downsample_pallas.1} parent=23 // pred_fallthru
        _
      // Predicated region
      $region37: #{downsample_pallas.1} parent=23 // pred_check
        %p331 = pneg %p132
      $region38: #{downsample_pallas.1} parent=23 // pred_check_branch
        %333 = sbr.rel (%p331) target = $region40
      $region39: #{downsample_pallas.1} parent=23 // pred_region
        %s334 = smul.u32 8, %s22
        %p335 = scmp.lt.s32.totalorder %s21, 1
        %s336 = scalar_select %p335, %s21, 1
        %p337 = scmp.lt.s32.totalorder %s334, 7
        %s338 = scalar_select %p337, %s334, 7
        %s339 = smul.addr %s338, 2
        %s340 = smul.addr %s336, 16
        %s341 = sadd.s32 %s339, %s340
        %s342 = smul.addr %s341, 4
        %s343 = scalar_lea.vmem %s3, %s342
        %s344 = smul.u32 8, %s22
      $region40: #{downsample_pallas.1} parent=23 // pred_fallthru
        _
      // Predicated region
      $region41: #{downsample_pallas.1} parent=23 // pred_check
        %p345 = pneg %p160
      $region42: #{downsample_pallas.1} parent=23 // pred_check_branch
        %347 = sbr.rel (%p345) target = $region44
      $region43: #{downsample_pallas.1} parent=23 // pred_region
        %s348 = smul.u32 8, %s22
        %p349 = scmp.lt.s32.totalorder %s21, 1
        %s350 = scalar_select %p349, %s21, 1
        %p351 = scmp.lt.s32.totalorder %s348, 7
        %s352 = scalar_select %p351, %s348, 7
        %s353 = smul.addr %s352, 2
        %s354 = smul.addr %s350, 16
        %s355 = sadd.s32 %s353, %s354
        %s356 = smul.addr %s355, 4
        %s357 = scalar_lea.vmem %s4, %s356
        %s358 = smul.u32 8, %s22
      $region44: #{downsample_pallas.1} parent=23 // pred_fallthru
        _
      // Predicated region
      $region45: #{downsample_pallas.1} parent=23 // pred_check
        %p359 = pneg %p188
      $region46: #{downsample_pallas.1} parent=23 // pred_check_branch
        %361 = sbr.rel (%p359) target = $region48
      $region47: #{downsample_pallas.1} parent=23 // pred_region
        %s362 = smul.u32 8, %s22
        %p363 = scmp.lt.s32.totalorder %s21, 1
        %s364 = scalar_select %p363, %s21, 1
        %p365 = scmp.lt.s32.totalorder %s362, 7
        %s366 = scalar_select %p365, %s362, 7
        %s367 = smul.addr %s366, 2
        %s368 = smul.addr %s364, 16
        %s369 = sadd.s32 %s367, %s368
        %s370 = smul.addr %s369, 4
        %s371 = scalar_lea.vmem %s5, %s370
        %s372 = smul.u32 8, %s22
      $region48: #{downsample_pallas.1} parent=23 // pred_fallthru
        _
    $region24: #{downsample_pallas.1} parent=5 // pred_fallthru
      _
    %p373 = scmp.le.s32.totalorder 1, %s14
    %p374 = scmp.lt.s32.totalorder %s14, 3
    %p375 = pnand %p373, %p374
    %p376 = pneg %p375
    // Predicated region
    $region49: #{downsample_pallas.1} parent=5 // pred_check
      _
    $region50: #{downsample_pallas.1} parent=5 // pred_check_branch
      %378 = sbr.rel (%p375) target = $region52
    $region51: #{downsample_pallas.1} parent=5 // pred_region
      %s379 = ssub.s32 %s14, 1
      %s380 = smul.u32 8, %s24
      %p381 = scmp.lt.s32.totalorder %s23, 1
      %s382 = scalar_select %p381, %s23, 1
      %p383 = scmp.lt.s32.totalorder %s380, 7
      %s384 = scalar_select %p383, %s380, 7
      %s385 = smul.addr %s384, 2
      %s386 = smul.addr %s382, 16
      %s387 = sadd.s32 %s385, %s386
      %s388 = smul.addr %s387, 4
      %s389 = scalar_lea.vmem %s0, %s388
      %p390 = pneg %p54
      %p391 = pneg %p51
      %s392 = smul.u32 8, %s24
      %p393 = scmp.lt.s32.totalorder %s23, 1
      %s394 = scalar_select %p393, %s23, 1
      %p395 = scmp.lt.s32.totalorder %s392, 7
      %s396 = scalar_select %p395, %s392, 7
      %s397 = smul.addr %s396, 2
      %s398 = smul.addr %s394, 16
      %s399 = sadd.s32 %s397, %s398
      %s400 = smul.addr %s399, 4
      %s401 = scalar_lea.vmem %s1, %s400
      %p402 = pneg %p82
      %p403 = pneg %p79
      %s404 = smul.u32 8, %s24
      %p405 = scmp.lt.s32.totalorder %s23, 1
      %s406 = scalar_select %p405, %s23, 1
      %p407 = scmp.lt.s32.totalorder %s404, 7
      %s408 = scalar_select %p407, %s404, 7
      %s409 = smul.addr %s408, 2
      %s410 = smul.addr %s406, 16
      %s411 = sadd.s32 %s409, %s410
      %s412 = smul.addr %s411, 4
      %s413 = scalar_lea.vmem %s2, %s412
      %p414 = pneg %p110
      %p415 = pneg %p107
      %s416 = smul.u32 8, %s24
      %p417 = scmp.lt.s32.totalorder %s23, 1
      %s418 = scalar_select %p417, %s23, 1
      %p419 = scmp.lt.s32.totalorder %s416, 7
      %s420 = scalar_select %p419, %s416, 7
      %s421 = smul.addr %s420, 2
      %s422 = smul.addr %s418, 16
      %s423 = sadd.s32 %s421, %s422
      %s424 = smul.addr %s423, 4
      %s425 = scalar_lea.vmem %s3, %s424
      %p426 = pneg %p138
      %p427 = pneg %p135
      %s428 = smul.u32 8, %s24
      %p429 = scmp.lt.s32.totalorder %s23, 1
      %s430 = scalar_select %p429, %s23, 1
      %p431 = scmp.lt.s32.totalorder %s428, 7
      %s432 = scalar_select %p431, %s428, 7
      %s433 = smul.addr %s432, 2
      %s434 = smul.addr %s430, 16
      %s435 = sadd.s32 %s433, %s434
      %s436 = smul.addr %s435, 4
      %s437 = scalar_lea.vmem %s4, %s436
      %p438 = pneg %p166
      %p439 = pneg %p163
      %s440 = smul.u32 8, %s24
      %p441 = scmp.lt.s32.totalorder %s23, 1
      %s442 = scalar_select %p441, %s23, 1
      %p443 = scmp.lt.s32.totalorder %s440, 7
      %s444 = scalar_select %p443, %s440, 7
      %s445 = smul.addr %s444, 2
      %s446 = smul.addr %s442, 16
      %s447 = sadd.s32 %s445, %s446
      %s448 = smul.addr %s447, 4
      %s449 = scalar_lea.vmem %s5, %s448
      %p450 = pneg %p194
      %p451 = pneg %p191
      %p452 = pneg %p215
      %p453 = pneg %p212
      %p454 = pneg %p236
      %p455 = pneg %p233
      %p456 = pneg %p264
      %p457 = pneg %p261
      %s458 = smul.u32 8, %s24
      %p459 = scmp.lt.s32.totalorder %s23, 1
      %s460 = scalar_select %p459, %s23, 1
      %p461 = scmp.lt.s32.totalorder %s458, 7
      %s462 = scalar_select %p461, %s458, 7
      %s463 = smul.addr %s460, 8
      %s464 = sadd.s32 %s462, %s463
      %s465 = smul.addr %s464, 4
      %s466 = scalar_lea.vmem %s8, %s465
      %s467 = smul.u32 8, %s24
      %p468 = scmp.lt.s32.totalorder %s23, 1
      %s469 = scalar_select %p468, %s23, 1
      %p470 = scmp.lt.s32.totalorder %s467, 7
      %s471 = scalar_select %p470, %s467, 7
      %s472 = smul.addr %s471, 2
      %s473 = smul.addr %s469, 16
      %s474 = sadd.s32 %s472, %s473
      %s475 = smul.addr %s474, 4
      %s476 = scalar_lea.vmem %s0, %s475
      %s477 = smul.u32 8, %s24
      %s478 = smul.u32 8, %s24
      %p479 = scmp.lt.s32.totalorder %s23, 1
      %s480 = scalar_select %p479, %s23, 1
      %p481 = scmp.lt.s32.totalorder %s478, 7
      %s482 = scalar_select %p481, %s478, 7
      %s483 = smul.addr %s482, 2
      %s484 = smul.addr %s480, 16
      %s485 = sadd.s32 %s483, %s484
      %s486 = smul.addr %s485, 4
      %s487 = scalar_lea.vmem %s1, %s486
      %s488 = smul.u32 8, %s24
      %s489 = smul.u32 8, %s24
      %p490 = scmp.lt.s32.totalorder %s23, 1
      %s491 = scalar_select %p490, %s23, 1
      %p492 = scmp.lt.s32.totalorder %s489, 7
      %s493 = scalar_select %p492, %s489, 7
      %s494 = smul.addr %s493, 2
      %s495 = smul.addr %s491, 16
      %s496 = sadd.s32 %s494, %s495
      %s497 = smul.addr %s496, 4
      %s498 = scalar_lea.vmem %s2, %s497
      %s499 = smul.u32 8, %s24
      %s500 = smul.u32 8, %s24
      %p501 = scmp.lt.s32.totalorder %s23, 1
      %s502 = scalar_select %p501, %s23, 1
      %p503 = scmp.lt.s32.totalorder %s500, 7
      %s504 = scalar_select %p503, %s500, 7
      %s505 = smul.addr %s504, 2
      %s506 = smul.addr %s502, 16
      %s507 = sadd.s32 %s505, %s506
      %s508 = smul.addr %s507, 4
      %s509 = scalar_lea.vmem %s3, %s508
      %s510 = smul.u32 8, %s24
      %s511 = smul.u32 8, %s24
      %p512 = scmp.lt.s32.totalorder %s23, 1
      %s513 = scalar_select %p512, %s23, 1
      %p514 = scmp.lt.s32.totalorder %s511, 7
      %s515 = scalar_select %p514, %s511, 7
      %s516 = smul.addr %s515, 2
      %s517 = smul.addr %s513, 16
      %s518 = sadd.s32 %s516, %s517
      %s519 = smul.addr %s518, 4
      %s520 = scalar_lea.vmem %s4, %s519
      %s521 = smul.u32 8, %s24
      %s522 = smul.u32 8, %s24
      %p523 = scmp.lt.s32.totalorder %s23, 1
      %s524 = scalar_select %p523, %s23, 1
      %p525 = scmp.lt.s32.totalorder %s522, 7
      %s526 = scalar_select %p525, %s522, 7
      %s527 = smul.addr %s526, 2
      %s528 = smul.addr %s524, 16
      %s529 = sadd.s32 %s527, %s528
      %s530 = smul.addr %s529, 4
      %s531 = scalar_lea.vmem %s5, %s530
      %s532 = smul.u32 8, %s24
      %s533 = smul.u32 8, %s24
      %p534 = scmp.lt.s32.totalorder %s23, 1
      %s535 = scalar_select %p534, %s23, 1
      %p536 = scmp.lt.s32.totalorder %s533, 7
      %s537 = scalar_select %p536, %s533, 7
      %s538 = smul.addr %s535, 8
      %s539 = sadd.s32 %s537, %s538
      %s540 = smul.addr %s539, 4
      %s541 = scalar_lea.vmem %s8, %s540
      %s542 = smul.u32 8, %s24
      %v544 = vld [vmem:[%s7] sm:$0x1]
      %v546 = vperm.slane %v544, 0
      %v548 = vld [vmem:[%s476] sm:$0xf]
      %v549 = vld [vmem:[%s476 + $0x8] sm:$0xf]
      %v550 = vld [vmem:[%s476 + $0x10] sm:$0xf]
      %v551 = vld [vmem:[%s476 + $0x18] sm:$0xf]
      %v552 = vld [vmem:[%s476 + $0x20] sm:$0xf]
      %v553 = vld [vmem:[%s476 + $0x28] sm:$0xf]
      %v554 = vld [vmem:[%s476 + $0x30] sm:$0xf]
      %v555 = vld [vmem:[%s476 + $0x38] sm:$0xf]
      %v556 = vld [vmem:[%s6] sm:$0x3]
      %v565 = vunpack.c.l.b16 %v548
      %v566 = vunpack.c.l.b16 %v549
      %v567 = vunpack.c.l.b16 %v550
      %v568 = vunpack.c.l.b16 %v551
      %v569 = vunpack.c.l.b16 %v552
      %v570 = vunpack.c.l.b16 %v553
      %v571 = vunpack.c.l.b16 %v554
      %v572 = vunpack.c.l.b16 %v555
      %v573 = vpack.c.b16 %v566, %v565
      %v574 = vpack.c.b16 %v568, %v567
      %v575 = vpack.c.b16 %v570, %v569
      %v576 = vpack.c.b16 %v572, %v571
      %vm577 = vcmask 31744
      %v579 = vsel %vm577, %v573, 0
      %v582 = vsel %vm577, %v574, 0
      %v585 = vsel %vm577, %v575, 0
      %v588 = vsel %vm577, %v576, 0
      %vm590 = vcmask 1041408
      %v592 = vsel %vm590, %v556, 0
      %594 = vmatpush.bf16.msra.mxu0 0
      %595 = vmatpush.bf16.msra.mxu0 0
      %596 = vmatpush.bf16.msra.mxu0 0
      %597 = vmatpush.bf16.msra.mxu0 0
      %598 = vmatpush.bf16.msra.mxu0 0
      %599 = vmatpush.bf16.msra.mxu0 0
      %600 = vmatpush.bf16.msra.mxu0 0
      %601 = vmatpush.bf16.msra.mxu0 %v592
      %602 = vmatmul.bf16.gmra.mxu0 %v579
      %v603 = vpop.f32.mrf.mxu0
      %v604 = vadd.f32 0.0, %v603
      %v605 = vpop.f32.mrf.mxu0
      %v606 = vadd.f32 0.0, %v605
      %607 = vmatmul.bf16.gmra.mxu0 %v582
      %v608 = vpop.f32.mrf.mxu0
      %v609 = vadd.f32 0.0, %v608
      %v610 = vpop.f32.mrf.mxu0
      %v611 = vadd.f32 0.0, %v610
      %612 = vmatmul.bf16.gmra.mxu0 %v585
      %v613 = vpop.f32.mrf.mxu0
      %v614 = vadd.f32 0.0, %v613
      %v615 = vpop.f32.mrf.mxu0
      %v616 = vadd.f32 0.0, %v615
      %617 = vmatmul.bf16.gmra.mxu0 %v588
      %v618 = vpop.f32.mrf.mxu0
      %v619 = vadd.f32 0.0, %v618
      %v620 = vpop.f32.mrf.mxu0
      %v621 = vadd.f32 0.0, %v620
      %622 = vdwg.mxu0
      %v623 = vadd.f32 %v546, %v604
      %v624 = vadd.f32 %v546, %v606
      %v625 = vadd.f32 %v546, %v609
      %v626 = vadd.f32 %v546, %v611
      %v627 = vadd.f32 %v546, %v614
      %v628 = vadd.f32 %v546, %v616
      %v629 = vadd.f32 %v546, %v619
      %v630 = vadd.f32 %v546, %v621
      %v631 = vld [vmem:[%s487] sm:$0xf]
      %v632 = vld [vmem:[%s487 + $0x8] sm:$0xf]
      %v633 = vld [vmem:[%s487 + $0x10] sm:$0xf]
      %v634 = vld [vmem:[%s487 + $0x18] sm:$0xf]
      %v635 = vld [vmem:[%s487 + $0x20] sm:$0xf]
      %v636 = vld [vmem:[%s487 + $0x28] sm:$0xf]
      %v637 = vld [vmem:[%s487 + $0x30] sm:$0xf]
      %v638 = vld [vmem:[%s487 + $0x38] sm:$0xf]
      %s639 = scalar_lea.vmem %s6, 2
      %v640 = vld [vmem:[%s639] sm:$0x3]
      %v649 = vunpack.c.l.b16 %v631
      %v650 = vunpack.c.l.b16 %v632
      %v651 = vunpack.c.l.b16 %v633
      %v652 = vunpack.c.l.b16 %v634
      %v653 = vunpack.c.l.b16 %v635
      %v654 = vunpack.c.l.b16 %v636
      %v655 = vunpack.c.l.b16 %v637
      %v656 = vunpack.c.l.b16 %v638
      %v657 = vpack.c.b16 %v650, %v649
      %v658 = vpack.c.b16 %v652, %v651
      %v659 = vpack.c.b16 %v654, %v653
      %v660 = vpack.c.b16 %v656, %v655
      %v662 = vsel %vm577, %v657, 0
      %v665 = vsel %vm577, %v658, 0
      %v668 = vsel %vm577, %v659, 0
      %v671 = vsel %vm577, %v660, 0
      %v674 = vsel %vm590, %v640, 0
      %676 = vmatpush.bf16.msra.mxu0 0
      %677 = vmatpush.bf16.msra.mxu0 0
      %678 = vmatpush.bf16.msra.mxu0 0
      %679 = vmatpush.bf16.msra.mxu0 0
      %680 = vmatpush.bf16.msra.mxu0 0
      %681 = vmatpush.bf16.msra.mxu0 0
      %682 = vmatpush.bf16.msra.mxu0 0
      %683 = vmatpush.bf16.msra.mxu0 %v674
      %684 = vmatmul.bf16.gmra.mxu0 %v662
      %v685 = vpop.f32.mrf.mxu0
      %v686 = vadd.f32 0.0, %v685
      %v687 = vpop.f32.mrf.mxu0
      %v688 = vadd.f32 0.0, %v687
      %689 = vmatmul.bf16.gmra.mxu0 %v665
      %v690 = vpop.f32.mrf.mxu0
      %v691 = vadd.f32 0.0, %v690
      %v692 = vpop.f32.mrf.mxu0
      %v693 = vadd.f32 0.0, %v692
      %694 = vmatmul.bf16.gmra.mxu0 %v668
      %v695 = vpop.f32.mrf.mxu0
      %v696 = vadd.f32 0.0, %v695
      %v697 = vpop.f32.mrf.mxu0
      %v698 = vadd.f32 0.0, %v697
      %699 = vmatmul.bf16.gmra.mxu0 %v671
      %v700 = vpop.f32.mrf.mxu0
      %v701 = vadd.f32 0.0, %v700
      %v702 = vpop.f32.mrf.mxu0
      %v703 = vadd.f32 0.0, %v702
      %704 = vdwg.mxu0
      %v705 = vadd.f32 %v623, %v686
      %v706 = vadd.f32 %v624, %v688
      %v707 = vadd.f32 %v625, %v691
      %v708 = vadd.f32 %v626, %v693
      %v709 = vadd.f32 %v627, %v696
      %v710 = vadd.f32 %v628, %v698
      %v711 = vadd.f32 %v629, %v701
      %v712 = vadd.f32 %v630, %v703
      %v713 = vld [vmem:[%s476] sm:$0xf]
      %v714 = vld [vmem:[%s476 + $0x4] sm:$0x1]
      %v715 = vld [vmem:[%s476 + $0x8] sm:$0xf]
      %v716 = vld [vmem:[%s476 + $0xc] sm:$0x1]
      %v717 = vld [vmem:[%s476 + $0x10] sm:$0xf]
      %v718 = vld [vmem:[%s476 + $0x14] sm:$0x1]
      %v719 = vld [vmem:[%s476 + $0x18] sm:$0xf]
      %v720 = vld [vmem:[%s476 + $0x1c] sm:$0x1]
      %v721 = vld [vmem:[%s476 + $0x20] sm:$0xf]
      %v722 = vld [vmem:[%s476 + $0x24] sm:$0x1]
      %v723 = vld [vmem:[%s476 + $0x28] sm:$0xf]
      %v724 = vld [vmem:[%s476 + $0x2c] sm:$0x1]
      %v725 = vld [vmem:[%s476 + $0x30] sm:$0xf]
      %v726 = vld [vmem:[%s476 + $0x34] sm:$0x1]
      %v727 = vld [vmem:[%s476 + $0x38] sm:$0xf]
      %v728 = vld [vmem:[%s476 + $0x3c] sm:$0x1]
      %vm729 = vsmask.f32 3328
      %vm730 = vsmask.f32 7440
      %vm731 = vmor %vm729, %vm730
      %v733 = vshrl.u32 %v713, 16
      %v735 = vrot.slane %v733, 4
      %v736 = vshll.u32 %v713, 16
      %v738 = vrot.slane %v736, 5
      %v739 = vor.u32 %v735, %v738
      %v740 = vrot.slane %v739, 4
      %v742 = vshll.u32 %v714, 16
      %v744 = vrot.slane %v742, 5
      %v745 = vsel %vm731, %v740, %v744
      %v747 = vshrl.u32 %v715, 16
      %v749 = vrot.slane %v747, 4
      %v750 = vshll.u32 %v715, 16
      %v752 = vrot.slane %v750, 5
      %v753 = vor.u32 %v749, %v752
      %v754 = vrot.slane %v753, 4
      %v756 = vshll.u32 %v716, 16
      %v758 = vrot.slane %v756, 5
      %v759 = vsel %vm731, %v754, %v758
      %v761 = vshrl.u32 %v717, 16
      %v763 = vrot.slane %v761, 4
      %v764 = vshll.u32 %v717, 16
      %v766 = vrot.slane %v764, 5
      %v767 = vor.u32 %v763, %v766
      %v768 = vrot.slane %v767, 4
      %v770 = vshll.u32 %v718, 16
      %v772 = vrot.slane %v770, 5
      %v773 = vsel %vm731, %v768, %v772
      %v775 = vshrl.u32 %v719, 16
      %v777 = vrot.slane %v775, 4
      %v778 = vshll.u32 %v719, 16
      %v780 = vrot.slane %v778, 5
      %v781 = vor.u32 %v777, %v780
      %v782 = vrot.slane %v781, 4
      %v784 = vshll.u32 %v720, 16
      %v786 = vrot.slane %v784, 5
      %v787 = vsel %vm731, %v782, %v786
      %v789 = vshrl.u32 %v721, 16
      %v791 = vrot.slane %v789, 4
      %v792 = vshll.u32 %v721, 16
      %v794 = vrot.slane %v792, 5
      %v795 = vor.u32 %v791, %v794
      %v796 = vrot.slane %v795, 4
      %v798 = vshll.u32 %v722, 16
      %v800 = vrot.slane %v798, 5
      %v801 = vsel %vm731, %v796, %v800
      %v803 = vshrl.u32 %v723, 16
      %v805 = vrot.slane %v803, 4
      %v806 = vshll.u32 %v723, 16
      %v808 = vrot.slane %v806, 5
      %v809 = vor.u32 %v805, %v808
      %v810 = vrot.slane %v809, 4
      %v812 = vshll.u32 %v724, 16
      %v814 = vrot.slane %v812, 5
      %v815 = vsel %vm731, %v810, %v814
      %v817 = vshrl.u32 %v725, 16
      %v819 = vrot.slane %v817, 4
      %v820 = vshll.u32 %v725, 16
      %v822 = vrot.slane %v820, 5
      %v823 = vor.u32 %v819, %v822
      %v824 = vrot.slane %v823, 4
      %v826 = vshll.u32 %v726, 16
      %v828 = vrot.slane %v826, 5
      %v829 = vsel %vm731, %v824, %v828
      %v831 = vshrl.u32 %v727, 16
      %v833 = vrot.slane %v831, 4
      %v834 = vshll.u32 %v727, 16
      %v836 = vrot.slane %v834, 5
      %v837 = vor.u32 %v833, %v836
      %v838 = vrot.slane %v837, 4
      %v840 = vshll.u32 %v728, 16
      %v842 = vrot.slane %v840, 5
      %v843 = vsel %vm731, %v838, %v842
      %s844 = scalar_lea.vmem %s6, 4
      %v845 = vld [vmem:[%s844] sm:$0x3]
      %v846 = vunpack.c.l.b16 %v745
      %v847 = vunpack.c.l.b16 %v759
      %v848 = vunpack.c.l.b16 %v773
      %v849 = vunpack.c.l.b16 %v787
      %v850 = vunpack.c.l.b16 %v801
      %v851 = vunpack.c.l.b16 %v815
      %v852 = vunpack.c.l.b16 %v829
      %v853 = vunpack.c.l.b16 %v843
      %v854 = vpack.c.b16 %v847, %v846
      %v855 = vpack.c.b16 %v849, %v848
      %v856 = vpack.c.b16 %v851, %v850
      %v857 = vpack.c.b16 %v853, %v852
      %v859 = vsel %vm577, %v854, 0
      %v862 = vsel %vm577, %v855, 0
      %v865 = vsel %vm577, %v856, 0
      %v868 = vsel %vm577, %v857, 0
      %v871 = vsel %vm590, %v845, 0
      %873 = vmatpush.bf16.msra.mxu0 0
      %874 = vmatpush.bf16.msra.mxu0 0
      %875 = vmatpush.bf16.msra.mxu0 0
      %876 = vmatpush.bf16.msra.mxu0 0
      %877 = vmatpush.bf16.msra.mxu0 0
      %878 = vmatpush.bf16.msra.mxu0 0
      %879 = vmatpush.bf16.msra.mxu0 0
      %880 = vmatpush.bf16.msra.mxu0 %v871
      %881 = vmatmul.bf16.gmra.mxu0 %v859
      %v882 = vpop.f32.mrf.mxu0
      %v883 = vadd.f32 0.0, %v882
      %v884 = vpop.f32.mrf.mxu0
      %v885 = vadd.f32 0.0, %v884
      %886 = vmatmul.bf16.gmra.mxu0 %v862
      %v887 = vpop.f32.mrf.mxu0
      %v888 = vadd.f32 0.0, %v887
      %v889 = vpop.f32.mrf.mxu0
      %v890 = vadd.f32 0.0, %v889
      %891 = vmatmul.bf16.gmra.mxu0 %v865
      %v892 = vpop.f32.mrf.mxu0
      %v893 = vadd.f32 0.0, %v892
      %v894 = vpop.f32.mrf.mxu0
      %v895 = vadd.f32 0.0, %v894
      %896 = vmatmul.bf16.gmra.mxu0 %v868
      %v897 = vpop.f32.mrf.mxu0
      %v898 = vadd.f32 0.0, %v897
      %v899 = vpop.f32.mrf.mxu0
      %v900 = vadd.f32 0.0, %v899
      %901 = vdwg.mxu0
      %v902 = vadd.f32 %v705, %v883
      %v903 = vadd.f32 %v706, %v885
      %v904 = vadd.f32 %v707, %v888
      %v905 = vadd.f32 %v708, %v890
      %v906 = vadd.f32 %v709, %v893
      %v907 = vadd.f32 %v710, %v895
      %v908 = vadd.f32 %v711, %v898
      %v909 = vadd.f32 %v712, %v900
      %v910 = vld [vmem:[%s498] sm:$0xf]
      %v911 = vld [vmem:[%s498 + $0x8] sm:$0xf]
      %v912 = vld [vmem:[%s498 + $0x10] sm:$0xf]
      %v913 = vld [vmem:[%s498 + $0x18] sm:$0xf]
      %v914 = vld [vmem:[%s498 + $0x20] sm:$0xf]
      %v915 = vld [vmem:[%s498 + $0x28] sm:$0xf]
      %v916 = vld [vmem:[%s498 + $0x30] sm:$0xf]
      %v917 = vld [vmem:[%s498 + $0x38] sm:$0xf]
      %s918 = scalar_lea.vmem %s6, 6
      %v919 = vld [vmem:[%s918] sm:$0x3]
      %v928 = vunpack.c.l.b16 %v910
      %v929 = vunpack.c.l.b16 %v911
      %v930 = vunpack.c.l.b16 %v912
      %v931 = vunpack.c.l.b16 %v913
      %v932 = vunpack.c.l.b16 %v914
      %v933 = vunpack.c.l.b16 %v915
      %v934 = vunpack.c.l.b16 %v916
      %v935 = vunpack.c.l.b16 %v917
      %v936 = vpack.c.b16 %v929, %v928
      %v937 = vpack.c.b16 %v931, %v930
      %v938 = vpack.c.b16 %v933, %v932
      %v939 = vpack.c.b16 %v935, %v934
      %v941 = vsel %vm577, %v936, 0
      %v944 = vsel %vm577, %v937, 0
      %v947 = vsel %vm577, %v938, 0
      %v950 = vsel %vm577, %v939, 0
      %v953 = vsel %vm590, %v919, 0
      %955 = vmatpush.bf16.msra.mxu0 0
      %956 = vmatpush.bf16.msra.mxu0 0
      %957 = vmatpush.bf16.msra.mxu0 0
      %958 = vmatpush.bf16.msra.mxu0 0
      %959 = vmatpush.bf16.msra.mxu0 0
      %960 = vmatpush.bf16.msra.mxu0 0
      %961 = vmatpush.bf16.msra.mxu0 0
      %962 = vmatpush.bf16.msra.mxu0 %v953
      %963 = vmatmul.bf16.gmra.mxu0 %v941
      %v964 = vpop.f32.mrf.mxu0
      %v965 = vadd.f32 0.0, %v964
      %v966 = vpop.f32.mrf.mxu0
      %v967 = vadd.f32 0.0, %v966
      %968 = vmatmul.bf16.gmra.mxu0 %v944
      %v969 = vpop.f32.mrf.mxu0
      %v970 = vadd.f32 0.0, %v969
      %v971 = vpop.f32.mrf.mxu0
      %v972 = vadd.f32 0.0, %v971
      %973 = vmatmul.bf16.gmra.mxu0 %v947
      %v974 = vpop.f32.mrf.mxu0
      %v975 = vadd.f32 0.0, %v974
      %v976 = vpop.f32.mrf.mxu0
      %v977 = vadd.f32 0.0, %v976
      %978 = vmatmul.bf16.gmra.mxu0 %v950
      %v979 = vpop.f32.mrf.mxu0
      %v980 = vadd.f32 0.0, %v979
      %v981 = vpop.f32.mrf.mxu0
      %v982 = vadd.f32 0.0, %v981
      %983 = vdwg.mxu0
      %v984 = vadd.f32 %v902, %v965
      %v985 = vadd.f32 %v903, %v967
      %v986 = vadd.f32 %v904, %v970
      %v987 = vadd.f32 %v905, %v972
      %v988 = vadd.f32 %v906, %v975
      %v989 = vadd.f32 %v907, %v977
      %v990 = vadd.f32 %v908, %v980
      %v991 = vadd.f32 %v909, %v982
      %v992 = vld [vmem:[%s509] sm:$0xf]
      %v993 = vld [vmem:[%s509 + $0x8] sm:$0xf]
      %v994 = vld [vmem:[%s509 + $0x10] sm:$0xf]
      %v995 = vld [vmem:[%s509 + $0x18] sm:$0xf]
      %v996 = vld [vmem:[%s509 + $0x20] sm:$0xf]
      %v997 = vld [vmem:[%s509 + $0x28] sm:$0xf]
      %v998 = vld [vmem:[%s509 + $0x30] sm:$0xf]
      %v999 = vld [vmem:[%s509 + $0x38] sm:$0xf]
      %s1000 = scalar_lea.vmem %s6, 8
      %v1001 = vld [vmem:[%s1000] sm:$0x3]
      %v1010 = vunpack.c.l.b16 %v992
      %v1011 = vunpack.c.l.b16 %v993
      %v1012 = vunpack.c.l.b16 %v994
      %v1013 = vunpack.c.l.b16 %v995
      %v1014 = vunpack.c.l.b16 %v996
      %v1015 = vunpack.c.l.b16 %v997
      %v1016 = vunpack.c.l.b16 %v998
      %v1017 = vunpack.c.l.b16 %v999
      %v1018 = vpack.c.b16 %v1011, %v1010
      %v1019 = vpack.c.b16 %v1013, %v1012
      %v1020 = vpack.c.b16 %v1015, %v1014
      %v1021 = vpack.c.b16 %v1017, %v1016
      %v1023 = vsel %vm577, %v1018, 0
      %v1026 = vsel %vm577, %v1019, 0
      %v1029 = vsel %vm577, %v1020, 0
      %v1032 = vsel %vm577, %v1021, 0
      %v1035 = vsel %vm590, %v1001, 0
      %1037 = vmatpush.bf16.msra.mxu0 0
      %1038 = vmatpush.bf16.msra.mxu0 0
      %1039 = vmatpush.bf16.msra.mxu0 0
      %1040 = vmatpush.bf16.msra.mxu0 0
      %1041 = vmatpush.bf16.msra.mxu0 0
      %1042 = vmatpush.bf16.msra.mxu0 0
      %1043 = vmatpush.bf16.msra.mxu0 0
      %1044 = vmatpush.bf16.msra.mxu0 %v1035
      %1045 = vmatmul.bf16.gmra.mxu0 %v1023
      %v1046 = vpop.f32.mrf.mxu0
      %v1047 = vadd.f32 0.0, %v1046
      %v1048 = vpop.f32.mrf.mxu0
      %v1049 = vadd.f32 0.0, %v1048
      %1050 = vmatmul.bf16.gmra.mxu0 %v1026
      %v1051 = vpop.f32.mrf.mxu0
      %v1052 = vadd.f32 0.0, %v1051
      %v1053 = vpop.f32.mrf.mxu0
      %v1054 = vadd.f32 0.0, %v1053
      %1055 = vmatmul.bf16.gmra.mxu0 %v1029
      %v1056 = vpop.f32.mrf.mxu0
      %v1057 = vadd.f32 0.0, %v1056
      %v1058 = vpop.f32.mrf.mxu0
      %v1059 = vadd.f32 0.0, %v1058
      %1060 = vmatmul.bf16.gmra.mxu0 %v1032
      %v1061 = vpop.f32.mrf.mxu0
      %v1062 = vadd.f32 0.0, %v1061
      %v1063 = vpop.f32.mrf.mxu0
      %v1064 = vadd.f32 0.0, %v1063
      %1065 = vdwg.mxu0
      %v1066 = vadd.f32 %v984, %v1047
      %v1067 = vadd.f32 %v985, %v1049
      %v1068 = vadd.f32 %v986, %v1052
      %v1069 = vadd.f32 %v987, %v1054
      %v1070 = vadd.f32 %v988, %v1057
      %v1071 = vadd.f32 %v989, %v1059
      %v1072 = vadd.f32 %v990, %v1062
      %v1073 = vadd.f32 %v991, %v1064
      %v1074 = vld [vmem:[%s498] sm:$0xf]
      %v1075 = vld [vmem:[%s498 + $0x4] sm:$0x1]
      %v1076 = vld [vmem:[%s498 + $0x8] sm:$0xf]
      %v1077 = vld [vmem:[%s498 + $0xc] sm:$0x1]
      %v1078 = vld [vmem:[%s498 + $0x10] sm:$0xf]
      %v1079 = vld [vmem:[%s498 + $0x14] sm:$0x1]
      %v1080 = vld [vmem:[%s498 + $0x18] sm:$0xf]
      %v1081 = vld [vmem:[%s498 + $0x1c] sm:$0x1]
      %v1082 = vld [vmem:[%s498 + $0x20] sm:$0xf]
      %v1083 = vld [vmem:[%s498 + $0x24] sm:$0x1]
      %v1084 = vld [vmem:[%s498 + $0x28] sm:$0xf]
      %v1085 = vld [vmem:[%s498 + $0x2c] sm:$0x1]
      %v1086 = vld [vmem:[%s498 + $0x30] sm:$0xf]
      %v1087 = vld [vmem:[%s498 + $0x34] sm:$0x1]
      %v1088 = vld [vmem:[%s498 + $0x38] sm:$0xf]
      %v1089 = vld [vmem:[%s498 + $0x3c] sm:$0x1]
      %v1091 = vshrl.u32 %v1074, 16
      %v1093 = vrot.slane %v1091, 4
      %v1094 = vshll.u32 %v1074, 16
      %v1096 = vrot.slane %v1094, 5
      %v1097 = vor.u32 %v1093, %v1096
      %v1098 = vrot.slane %v1097, 4
      %v1100 = vshll.u32 %v1075, 16
      %v1102 = vrot.slane %v1100, 5
      %v1103 = vsel %vm731, %v1098, %v1102
      %v1105 = vshrl.u32 %v1076, 16
      %v1107 = vrot.slane %v1105, 4
      %v1108 = vshll.u32 %v1076, 16
      %v1110 = vrot.slane %v1108, 5
      %v1111 = vor.u32 %v1107, %v1110
      %v1112 = vrot.slane %v1111, 4
      %v1114 = vshll.u32 %v1077, 16
      %v1116 = vrot.slane %v1114, 5
      %v1117 = vsel %vm731, %v1112, %v1116
      %v1119 = vshrl.u32 %v1078, 16
      %v1121 = vrot.slane %v1119, 4
      %v1122 = vshll.u32 %v1078, 16
      %v1124 = vrot.slane %v1122, 5
      %v1125 = vor.u32 %v1121, %v1124
      %v1126 = vrot.slane %v1125, 4
      %v1128 = vshll.u32 %v1079, 16
      %v1130 = vrot.slane %v1128, 5
      %v1131 = vsel %vm731, %v1126, %v1130
      %v1133 = vshrl.u32 %v1080, 16
      %v1135 = vrot.slane %v1133, 4
      %v1136 = vshll.u32 %v1080, 16
      %v1138 = vrot.slane %v1136, 5
      %v1139 = vor.u32 %v1135, %v1138
      %v1140 = vrot.slane %v1139, 4
      %v1142 = vshll.u32 %v1081, 16
      %v1144 = vrot.slane %v1142, 5
      %v1145 = vsel %vm731, %v1140, %v1144
      %v1147 = vshrl.u32 %v1082, 16
      %v1149 = vrot.slane %v1147, 4
      %v1150 = vshll.u32 %v1082, 16
      %v1152 = vrot.slane %v1150, 5
      %v1153 = vor.u32 %v1149, %v1152
      %v1154 = vrot.slane %v1153, 4
      %v1156 = vshll.u32 %v1083, 16
      %v1158 = vrot.slane %v1156, 5
      %v1159 = vsel %vm731, %v1154, %v1158
      %v1161 = vshrl.u32 %v1084, 16
      %v1163 = vrot.slane %v1161, 4
      %v1164 = vshll.u32 %v1084, 16
      %v1166 = vrot.slane %v1164, 5
      %v1167 = vor.u32 %v1163, %v1166
      %v1168 = vrot.slane %v1167, 4
      %v1170 = vshll.u32 %v1085, 16
      %v1172 = vrot.slane %v1170, 5
      %v1173 = vsel %vm731, %v1168, %v1172
      %v1175 = vshrl.u32 %v1086, 16
      %v1177 = vrot.slane %v1175, 4
      %v1178 = vshll.u32 %v1086, 16
      %v1180 = vrot.slane %v1178, 5
      %v1181 = vor.u32 %v1177, %v1180
      %v1182 = vrot.slane %v1181, 4
      %v1184 = vshll.u32 %v1087, 16
      %v1186 = vrot.slane %v1184, 5
      %v1187 = vsel %vm731, %v1182, %v1186
      %v1189 = vshrl.u32 %v1088, 16
      %v1191 = vrot.slane %v1189, 4
      %v1192 = vshll.u32 %v1088, 16
      %v1194 = vrot.slane %v1192, 5
      %v1195 = vor.u32 %v1191, %v1194
      %v1196 = vrot.slane %v1195, 4
      %v1198 = vshll.u32 %v1089, 16
      %v1200 = vrot.slane %v1198, 5
      %v1201 = vsel %vm731, %v1196, %v1200
      %s1202 = scalar_lea.vmem %s6, 10
      %v1203 = vld [vmem:[%s1202] sm:$0x3]
      %v1204 = vunpack.c.l.b16 %v1103
      %v1205 = vunpack.c.l.b16 %v1117
      %v1206 = vunpack.c.l.b16 %v1131
      %v1207 = vunpack.c.l.b16 %v1145
      %v1208 = vunpack.c.l.b16 %v1159
      %v1209 = vunpack.c.l.b16 %v1173
      %v1210 = vunpack.c.l.b16 %v1187
      %v1211 = vunpack.c.l.b16 %v1201
      %v1212 = vpack.c.b16 %v1205, %v1204
      %v1213 = vpack.c.b16 %v1207, %v1206
      %v1214 = vpack.c.b16 %v1209, %v1208
      %v1215 = vpack.c.b16 %v1211, %v1210
      %v1217 = vsel %vm577, %v1212, 0
      %v1220 = vsel %vm577, %v1213, 0
      %v1223 = vsel %vm577, %v1214, 0
      %v1226 = vsel %vm577, %v1215, 0
      %v1229 = vsel %vm590, %v1203, 0
      %1231 = vmatpush.bf16.msra.mxu0 0
      %1232 = vmatpush.bf16.msra.mxu0 0
      %1233 = vmatpush.bf16.msra.mxu0 0
      %1234 = vmatpush.bf16.msra.mxu0 0
      %1235 = vmatpush.bf16.msra.mxu0 0
      %1236 = vmatpush.bf16.msra.mxu0 0
      %1237 = vmatpush.bf16.msra.mxu0 0
      %1238 = vmatpush.bf16.msra.mxu0 %v1229
      %1239 = vmatmul.bf16.gmra.mxu0 %v1217
      %v1240 = vpop.f32.mrf.mxu0
      %v1241 = vadd.f32 0.0, %v1240
      %v1242 = vpop.f32.mrf.mxu0
      %v1243 = vadd.f32 0.0, %v1242
      %1244 = vmatmul.bf16.gmra.mxu0 %v1220
      %v1245 = vpop.f32.mrf.mxu0
      %v1246 = vadd.f32 0.0, %v1245
      %v1247 = vpop.f32.mrf.mxu0
      %v1248 = vadd.f32 0.0, %v1247
      %1249 = vmatmul.bf16.gmra.mxu0 %v1223
      %v1250 = vpop.f32.mrf.mxu0
      %v1251 = vadd.f32 0.0, %v1250
      %v1252 = vpop.f32.mrf.mxu0
      %v1253 = vadd.f32 0.0, %v1252
      %1254 = vmatmul.bf16.gmra.mxu0 %v1226
      %v1255 = vpop.f32.mrf.mxu0
      %v1256 = vadd.f32 0.0, %v1255
      %v1257 = vpop.f32.mrf.mxu0
      %v1258 = vadd.f32 0.0, %v1257
      %1259 = vdwg.mxu0
      %v1260 = vadd.f32 %v1066, %v1241
      %v1261 = vadd.f32 %v1067, %v1243
      %v1262 = vadd.f32 %v1068, %v1246
      %v1263 = vadd.f32 %v1069, %v1248
      %v1264 = vadd.f32 %v1070, %v1251
      %v1265 = vadd.f32 %v1071, %v1253
      %v1266 = vadd.f32 %v1072, %v1256
      %v1267 = vadd.f32 %v1073, %v1258
      %v1268 = vld [vmem:[%s520] sm:$0xf]
      %v1269 = vld [vmem:[%s520 + $0x8] sm:$0xf]
      %v1270 = vld [vmem:[%s520 + $0x10] sm:$0xf]
      %v1271 = vld [vmem:[%s520 + $0x18] sm:$0xf]
      %v1272 = vld [vmem:[%s520 + $0x20] sm:$0xf]
      %v1273 = vld [vmem:[%s520 + $0x28] sm:$0xf]
      %v1274 = vld [vmem:[%s520 + $0x30] sm:$0xf]
      %v1275 = vld [vmem:[%s520 + $0x38] sm:$0xf]
      %s1276 = scalar_lea.vmem %s6, 12
      %v1277 = vld [vmem:[%s1276] sm:$0x3]
      %v1286 = vunpack.c.l.b16 %v1268
      %v1287 = vunpack.c.l.b16 %v1269
      %v1288 = vunpack.c.l.b16 %v1270
      %v1289 = vunpack.c.l.b16 %v1271
      %v1290 = vunpack.c.l.b16 %v1272
      %v1291 = vunpack.c.l.b16 %v1273
      %v1292 = vunpack.c.l.b16 %v1274
      %v1293 = vunpack.c.l.b16 %v1275
      %v1294 = vpack.c.b16 %v1287, %v1286
      %v1295 = vpack.c.b16 %v1289, %v1288
      %v1296 = vpack.c.b16 %v1291, %v1290
      %v1297 = vpack.c.b16 %v1293, %v1292
      %v1299 = vsel %vm577, %v1294, 0
      %v1302 = vsel %vm577, %v1295, 0
      %v1305 = vsel %vm577, %v1296, 0
      %v1308 = vsel %vm577, %v1297, 0
      %v1311 = vsel %vm590, %v1277, 0
      %1313 = vmatpush.bf16.msra.mxu0 0
      %1314 = vmatpush.bf16.msra.mxu0 0
      %1315 = vmatpush.bf16.msra.mxu0 0
      %1316 = vmatpush.bf16.msra.mxu0 0
      %1317 = vmatpush.bf16.msra.mxu0 0
      %1318 = vmatpush.bf16.msra.mxu0 0
      %1319 = vmatpush.bf16.msra.mxu0 0
      %1320 = vmatpush.bf16.msra.mxu0 %v1311
      %1321 = vmatmul.bf16.gmra.mxu0 %v1299
      %v1322 = vpop.f32.mrf.mxu0
      %v1323 = vadd.f32 0.0, %v1322
      %v1324 = vpop.f32.mrf.mxu0
      %v1325 = vadd.f32 0.0, %v1324
      %1326 = vmatmul.bf16.gmra.mxu0 %v1302
      %v1327 = vpop.f32.mrf.mxu0
      %v1328 = vadd.f32 0.0, %v1327
      %v1329 = vpop.f32.mrf.mxu0
      %v1330 = vadd.f32 0.0, %v1329
      %1331 = vmatmul.bf16.gmra.mxu0 %v1305
      %v1332 = vpop.f32.mrf.mxu0
      %v1333 = vadd.f32 0.0, %v1332
      %v1334 = vpop.f32.mrf.mxu0
      %v1335 = vadd.f32 0.0, %v1334
      %1336 = vmatmul.bf16.gmra.mxu0 %v1308
      %v1337 = vpop.f32.mrf.mxu0
      %v1338 = vadd.f32 0.0, %v1337
      %v1339 = vpop.f32.mrf.mxu0
      %v1340 = vadd.f32 0.0, %v1339
      %1341 = vdwg.mxu0
      %v1342 = vadd.f32 %v1260, %v1323
      %v1343 = vadd.f32 %v1261, %v1325
      %v1344 = vadd.f32 %v1262, %v1328
      %v1345 = vadd.f32 %v1263, %v1330
      %v1346 = vadd.f32 %v1264, %v1333
      %v1347 = vadd.f32 %v1265, %v1335
      %v1348 = vadd.f32 %v1266, %v1338
      %v1349 = vadd.f32 %v1267, %v1340
      %v1350 = vld [vmem:[%s531] sm:$0xf]
      %v1351 = vld [vmem:[%s531 + $0x8] sm:$0xf]
      %v1352 = vld [vmem:[%s531 + $0x10] sm:$0xf]
      %v1353 = vld [vmem:[%s531 + $0x18] sm:$0xf]
      %v1354 = vld [vmem:[%s531 + $0x20] sm:$0xf]
      %v1355 = vld [vmem:[%s531 + $0x28] sm:$0xf]
      %v1356 = vld [vmem:[%s531 + $0x30] sm:$0xf]
      %v1357 = vld [vmem:[%s531 + $0x38] sm:$0xf]
      %s1358 = scalar_lea.vmem %s6, 14
      %v1359 = vld [vmem:[%s1358] sm:$0x3]
      %v1368 = vunpack.c.l.b16 %v1350
      %v1369 = vunpack.c.l.b16 %v1351
      %v1370 = vunpack.c.l.b16 %v1352
      %v1371 = vunpack.c.l.b16 %v1353
      %v1372 = vunpack.c.l.b16 %v1354
      %v1373 = vunpack.c.l.b16 %v1355
      %v1374 = vunpack.c.l.b16 %v1356
      %v1375 = vunpack.c.l.b16 %v1357
      %v1376 = vpack.c.b16 %v1369, %v1368
      %v1377 = vpack.c.b16 %v1371, %v1370
      %v1378 = vpack.c.b16 %v1373, %v1372
      %v1379 = vpack.c.b16 %v1375, %v1374
      %v1381 = vsel %vm577, %v1376, 0
      %v1384 = vsel %vm577, %v1377, 0
      %v1387 = vsel %vm577, %v1378, 0
      %v1390 = vsel %vm577, %v1379, 0
      %v1393 = vsel %vm590, %v1359, 0
      %1395 = vmatpush.bf16.msra.mxu0 0
      %1396 = vmatpush.bf16.msra.mxu0 0
      %1397 = vmatpush.bf16.msra.mxu0 0
      %1398 = vmatpush.bf16.msra.mxu0 0
      %1399 = vmatpush.bf16.msra.mxu0 0
      %1400 = vmatpush.bf16.msra.mxu0 0
      %1401 = vmatpush.bf16.msra.mxu0 0
      %1402 = vmatpush.bf16.msra.mxu0 %v1393
      %1403 = vmatmul.bf16.gmra.mxu0 %v1381
      %v1404 = vpop.f32.mrf.mxu0
      %v1405 = vadd.f32 0.0, %v1404
      %v1406 = vpop.f32.mrf.mxu0
      %v1407 = vadd.f32 0.0, %v1406
      %1408 = vmatmul.bf16.gmra.mxu0 %v1384
      %v1409 = vpop.f32.mrf.mxu0
      %v1410 = vadd.f32 0.0, %v1409
      %v1411 = vpop.f32.mrf.mxu0
      %v1412 = vadd.f32 0.0, %v1411
      %1413 = vmatmul.bf16.gmra.mxu0 %v1387
      %v1414 = vpop.f32.mrf.mxu0
      %v1415 = vadd.f32 0.0, %v1414
      %v1416 = vpop.f32.mrf.mxu0
      %v1417 = vadd.f32 0.0, %v1416
      %1418 = vmatmul.bf16.gmra.mxu0 %v1390
      %v1419 = vpop.f32.mrf.mxu0
      %v1420 = vadd.f32 0.0, %v1419
      %v1421 = vpop.f32.mrf.mxu0
      %v1422 = vadd.f32 0.0, %v1421
      %1423 = vdwg.mxu0
      %v1424 = vadd.f32 %v1342, %v1405
      %v1425 = vadd.f32 %v1343, %v1407
      %v1426 = vadd.f32 %v1344, %v1410
      %v1427 = vadd.f32 %v1345, %v1412
      %v1428 = vadd.f32 %v1346, %v1415
      %v1429 = vadd.f32 %v1347, %v1417
      %v1430 = vadd.f32 %v1348, %v1420
      %v1431 = vadd.f32 %v1349, %v1422
      %v1432 = vld [vmem:[%s520] sm:$0xf]
      %v1433 = vld [vmem:[%s520 + $0x4] sm:$0x1]
      %v1434 = vld [vmem:[%s520 + $0x8] sm:$0xf]
      %v1435 = vld [vmem:[%s520 + $0xc] sm:$0x1]
      %v1436 = vld [vmem:[%s520 + $0x10] sm:$0xf]
      %v1437 = vld [vmem:[%s520 + $0x14] sm:$0x1]
      %v1438 = vld [vmem:[%s520 + $0x18] sm:$0xf]
      %v1439 = vld [vmem:[%s520 + $0x1c] sm:$0x1]
      %v1440 = vld [vmem:[%s520 + $0x20] sm:$0xf]
      %v1441 = vld [vmem:[%s520 + $0x24] sm:$0x1]
      %v1442 = vld [vmem:[%s520 + $0x28] sm:$0xf]
      %v1443 = vld [vmem:[%s520 + $0x2c] sm:$0x1]
      %v1444 = vld [vmem:[%s520 + $0x30] sm:$0xf]
      %v1445 = vld [vmem:[%s520 + $0x34] sm:$0x1]
      %v1446 = vld [vmem:[%s520 + $0x38] sm:$0xf]
      %v1447 = vld [vmem:[%s520 + $0x3c] sm:$0x1]
      %v1449 = vshrl.u32 %v1432, 16
      %v1451 = vrot.slane %v1449, 4
      %v1452 = vshll.u32 %v1432, 16
      %v1454 = vrot.slane %v1452, 5
      %v1455 = vor.u32 %v1451, %v1454
      %v1456 = vrot.slane %v1455, 4
      %v1458 = vshll.u32 %v1433, 16
      %v1460 = vrot.slane %v1458, 5
      %v1461 = vsel %vm731, %v1456, %v1460
      %v1463 = vshrl.u32 %v1434, 16
      %v1465 = vrot.slane %v1463, 4
      %v1466 = vshll.u32 %v1434, 16
      %v1468 = vrot.slane %v1466, 5
      %v1469 = vor.u32 %v1465, %v1468
      %v1470 = vrot.slane %v1469, 4
      %v1472 = vshll.u32 %v1435, 16
      %v1474 = vrot.slane %v1472, 5
      %v1475 = vsel %vm731, %v1470, %v1474
      %v1477 = vshrl.u32 %v1436, 16
      %v1479 = vrot.slane %v1477, 4
      %v1480 = vshll.u32 %v1436, 16
      %v1482 = vrot.slane %v1480, 5
      %v1483 = vor.u32 %v1479, %v1482
      %v1484 = vrot.slane %v1483, 4
      %v1486 = vshll.u32 %v1437, 16
      %v1488 = vrot.slane %v1486, 5
      %v1489 = vsel %vm731, %v1484, %v1488
      %v1491 = vshrl.u32 %v1438, 16
      %v1493 = vrot.slane %v1491, 4
      %v1494 = vshll.u32 %v1438, 16
      %v1496 = vrot.slane %v1494, 5
      %v1497 = vor.u32 %v1493, %v1496
      %v1498 = vrot.slane %v1497, 4
      %v1500 = vshll.u32 %v1439, 16
      %v1502 = vrot.slane %v1500, 5
      %v1503 = vsel %vm731, %v1498, %v1502
      %v1505 = vshrl.u32 %v1440, 16
      %v1507 = vrot.slane %v1505, 4
      %v1508 = vshll.u32 %v1440, 16
      %v1510 = vrot.slane %v1508, 5
      %v1511 = vor.u32 %v1507, %v1510
      %v1512 = vrot.slane %v1511, 4
      %v1514 = vshll.u32 %v1441, 16
      %v1516 = vrot.slane %v1514, 5
      %v1517 = vsel %vm731, %v1512, %v1516
      %v1519 = vshrl.u32 %v1442, 16
      %v1521 = vrot.slane %v1519, 4
      %v1522 = vshll.u32 %v1442, 16
      %v1524 = vrot.slane %v1522, 5
      %v1525 = vor.u32 %v1521, %v1524
      %v1526 = vrot.slane %v1525, 4
      %v1528 = vshll.u32 %v1443, 16
      %v1530 = vrot.slane %v1528, 5
      %v1531 = vsel %vm731, %v1526, %v1530
      %v1533 = vshrl.u32 %v1444, 16
      %v1535 = vrot.slane %v1533, 4
      %v1536 = vshll.u32 %v1444, 16
      %v1538 = vrot.slane %v1536, 5
      %v1539 = vor.u32 %v1535, %v1538
      %v1540 = vrot.slane %v1539, 4
      %v1542 = vshll.u32 %v1445, 16
      %v1544 = vrot.slane %v1542, 5
      %v1545 = vsel %vm731, %v1540, %v1544
      %v1547 = vshrl.u32 %v1446, 16
      %v1549 = vrot.slane %v1547, 4
      %v1550 = vshll.u32 %v1446, 16
      %v1552 = vrot.slane %v1550, 5
      %v1553 = vor.u32 %v1549, %v1552
      %v1554 = vrot.slane %v1553, 4
      %v1556 = vshll.u32 %v1447, 16
      %v1558 = vrot.slane %v1556, 5
      %v1559 = vsel %vm731, %v1554, %v1558
      %s1560 = scalar_lea.vmem %s6, 16
      %v1561 = vld [vmem:[%s1560] sm:$0x3]
      %v1562 = vunpack.c.l.b16 %v1461
      %v1563 = vunpack.c.l.b16 %v1475
      %v1564 = vunpack.c.l.b16 %v1489
      %v1565 = vunpack.c.l.b16 %v1503
      %v1566 = vunpack.c.l.b16 %v1517
      %v1567 = vunpack.c.l.b16 %v1531
      %v1568 = vunpack.c.l.b16 %v1545
      %v1569 = vunpack.c.l.b16 %v1559
      %v1570 = vpack.c.b16 %v1563, %v1562
      %v1571 = vpack.c.b16 %v1565, %v1564
      %v1572 = vpack.c.b16 %v1567, %v1566
      %v1573 = vpack.c.b16 %v1569, %v1568
      %v1575 = vsel %vm577, %v1570, 0
      %v1578 = vsel %vm577, %v1571, 0
      %v1581 = vsel %vm577, %v1572, 0
      %v1584 = vsel %vm577, %v1573, 0
      %v1587 = vsel %vm590, %v1561, 0
      %1589 = vmatpush.bf16.msra.mxu0 0
      %1590 = vmatpush.bf16.msra.mxu0 0
      %1591 = vmatpush.bf16.msra.mxu0 0
      %1592 = vmatpush.bf16.msra.mxu0 0
      %1593 = vmatpush.bf16.msra.mxu0 0
      %1594 = vmatpush.bf16.msra.mxu0 0
      %1595 = vmatpush.bf16.msra.mxu0 0
      %1596 = vmatpush.bf16.msra.mxu0 %v1587
      %1597 = vmatmul.bf16.gmra.mxu0 %v1575
      %v1598 = vpop.f32.mrf.mxu0
      %v1599 = vadd.f32 0.0, %v1598
      %v1600 = vpop.f32.mrf.mxu0
      %v1601 = vadd.f32 0.0, %v1600
      %1602 = vmatmul.bf16.gmra.mxu0 %v1578
      %v1603 = vpop.f32.mrf.mxu0
      %v1604 = vadd.f32 0.0, %v1603
      %v1605 = vpop.f32.mrf.mxu0
      %v1606 = vadd.f32 0.0, %v1605
      %1607 = vmatmul.bf16.gmra.mxu0 %v1581
      %v1608 = vpop.f32.mrf.mxu0
      %v1609 = vadd.f32 0.0, %v1608
      %v1610 = vpop.f32.mrf.mxu0
      %v1611 = vadd.f32 0.0, %v1610
      %1612 = vmatmul.bf16.gmra.mxu0 %v1584
      %v1613 = vpop.f32.mrf.mxu0
      %v1614 = vadd.f32 0.0, %v1613
      %v1615 = vpop.f32.mrf.mxu0
      %v1616 = vadd.f32 0.0, %v1615
      %1617 = vdwg.mxu0
      %v1618 = vadd.f32 %v1424, %v1599
      %v1619 = vadd.f32 %v1425, %v1601
      %v1620 = vadd.f32 %v1426, %v1604
      %v1621 = vadd.f32 %v1427, %v1606
      %v1622 = vadd.f32 %v1428, %v1609
      %v1623 = vadd.f32 %v1429, %v1611
      %v1624 = vadd.f32 %v1430, %v1614
      %v1625 = vadd.f32 %v1431, %v1616
      %v1626 = vpack.c.bf16 %v1618, %v1618
      %v1627 = vpack.c.bf16 %v1619, %v1619
      %v1628 = vpack.c.bf16 %v1620, %v1620
      %v1629 = vpack.c.bf16 %v1621, %v1621
      %v1630 = vpack.c.bf16 %v1622, %v1622
      %v1631 = vpack.c.bf16 %v1623, %v1623
      %v1632 = vpack.c.bf16 %v1624, %v1624
      %v1633 = vpack.c.bf16 %v1625, %v1625
      %1634 = vst [vmem:[%s541] sm:$0xf] %v1626
      %1635 = vst [vmem:[%s541 + $0x4] sm:$0xf] %v1627
      %1636 = vst [vmem:[%s541 + $0x8] sm:$0xf] %v1628
      %1637 = vst [vmem:[%s541 + $0xc] sm:$0xf] %v1629
      %1638 = vst [vmem:[%s541 + $0x10] sm:$0xf] %v1630
      %1639 = vst [vmem:[%s541 + $0x14] sm:$0xf] %v1631
      %1640 = vst [vmem:[%s541 + $0x18] sm:$0xf] %v1632
      %1641 = vst [vmem:[%s541 + $0x1c] sm:$0xf] %v1633
      %s1642 = smul.u32 8, %s24
      %p1643 = scmp.lt.s32.totalorder %s23, 1
      %s1644 = scalar_select %p1643, %s23, 1
      %p1645 = scmp.lt.s32.totalorder %s1642, 7
      %s1646 = scalar_select %p1645, %s1642, 7
      %s1647 = smul.addr %s1644, 8
      %s1648 = sadd.s32 %s1646, %s1647
      %s1649 = smul.addr %s1648, 4
      %s1650 = scalar_lea.vmem %s8, %s1649
      // Predicated region
      $region53: #{downsample_pallas.1} parent=51 // pred_check
        %p1651 = pneg %p261
      $region54: #{downsample_pallas.1} parent=51 // pred_check_branch
        %1653 = sbr.rel (%p1651) target = $region56
      $region55: #{downsample_pallas.1} parent=51 // pred_region
        %s1654 = smul.u32 8, %s24
      $region56: #{downsample_pallas.1} parent=51 // pred_fallthru
        _
    $region52: #{downsample_pallas.1} parent=5 // pred_fallthru
      _
    %p1655 = scmp.le.s32.totalorder 2, %s14
    // Predicated region
    $region57: #{downsample_pallas.1} parent=5 // pred_check
      %p1656 = pneg %p1655
    $region58: #{downsample_pallas.1} parent=5 // pred_check_branch
      %1658 = sbr.rel (%p1656) target = $region60
    $region59: #{downsample_pallas.1} parent=5 // pred_region
      %s1659 = ssub.s32 %s14, 2
      // Predicated region
      $region61: #{downsample_pallas.1} parent=59 // pred_check
        %p1660 = pneg %p267
      $region62: #{downsample_pallas.1} parent=59 // pred_check_branch
        %1662 = sbr.rel (%p1660) target = $region64
      $region63: #{downsample_pallas.1} parent=59 // pred_region
        %s1663 = smul.u32 8, %s26
        %p1664 = scmp.lt.s32.totalorder %s25, 1
        %s1665 = scalar_select %p1664, %s25, 1
        %p1666 = scmp.lt.s32.totalorder %s1663, 7
        %s1667 = scalar_select %p1666, %s1663, 7
        %s1668 = smul.addr %s1665, 8
        %s1669 = sadd.s32 %s1667, %s1668
        %s1670 = smul.addr %s1669, 4
        %s1671 = scalar_lea.vmem %s8, %s1670
      $region64: #{downsample_pallas.1} parent=59 // pred_fallthru
        _
    $region60: #{downsample_pallas.1} parent=5 // pred_fallthru
      _
  $region6: #{downsample_pallas.1} parent=0 // loop_footer
    %s18 = sadd.s32 1, %s14
  $region7: #{downsample_pallas.1} parent=0 // loop_footer_branch
    %13 = sbr.rel target = $region3
  $region8: #{downsample_pallas.1} parent=0 // loop_exit
    _

</llo_original>
